<compile_context>
chip_gen: v7x
topology: tpu7x:2x2x1
jax: 0.10.0
libtpu: 0.0.40
codegen_flags: <defaults>
</compile_context>

<pallas_src>
import functools
import math

import jax
import jax.numpy as jnp
from jax.experimental import pallas as pl
from jax.experimental.pallas import tpu as pltpu


def _rits_kernel(T, H, impute_weight, label_weight,
                 seq_ref, labtr_ref, par_ref, out_ref):
    Bp = out_ref.shape[0]

    seq = seq_ref[...]                       # [3*Bp, T]
    vals = seq[0:Bp, :]                      # [Bp, T]
    msks = seq[Bp:2 * Bp, :]
    dlts = seq[2 * Bp:3 * Bp, :]

    par = par_ref[...]                       # [H+8, 4H]
    whh = par[0:H, :]                        # [H, 4H] == W_hh^T (gate order i,f,g,o)
    extra = par[H:, :]                       # [8, 4H]
    wih_x = extra[0:1, :]                    # [1, 4H]  W_ih column for x_c
    wih_m = extra[1:2, :]                    # [1, 4H]  W_ih column for m
    b_all = extra[2:3, :]                    # [1, 4H]  b_ih + b_hh
    prow = extra[3:4, :]                     # [1, 4H]  packed row vectors
    wdec = prow[:, 0:H]                      # [1, H]
    bdec = prow[:, H:2 * H]
    wreg = prow[:, 2 * H:3 * H]
    wout = prow[:, 3 * H:4 * H]
    srow = extra[4:5, :]                     # [1, 4H]  packed scalars
    breg = srow[:, 0:1]                      # [1, 1]
    bout = srow[:, 1:2]

    labels = labtr_ref[:, 0:1]               # [Bp, 1]
    istrain = labtr_ref[:, 1:2]              # [Bp, 1]

    h = jnp.zeros((Bp, H), jnp.float32)
    c = jnp.zeros((Bp, H), jnp.float32)
    x_loss = jnp.zeros((1, 1), jnp.float32)

    # T is a static Python int -> fully unrolled recurrence.
    for t in range(T):
        x = vals[:, t:t + 1]                 # [Bp, 1]
        m = msks[:, t:t + 1]
        d = dlts[:, t:t + 1]

        # temporal decay: gamma = exp(-relu(d @ W_decay^T + b_decay))
        gamma = jnp.exp(-jnp.maximum(d * wdec + bdec, 0.0))       # [Bp, H]
        h = h * gamma

        # regression: x_h = h @ W_reg^T + b_reg
        x_h = jnp.sum(h * wreg, axis=1, keepdims=True) + breg     # [Bp, 1]
        x_c = m * x + (1.0 - m) * x_h

        num = jnp.sum(jnp.abs(x - x_h) * m, axis=(0, 1), keepdims=True)
        den = jnp.sum(m, axis=(0, 1), keepdims=True) + 1e-5
        x_loss = x_loss + num * pl.reciprocal(den, approx=True)

        # LSTMCell: all four gates in one lane-dense [Bp, 4H] tensor
        # (PyTorch gate order i, f, g, o along the 4H axis).
        gates = (x_c * wih_x + m * wih_m
                 + jnp.dot(h, whh, preferred_element_type=jnp.float32)
                 + b_all)                                          # [Bp, 4H]
        i_g = jax.nn.sigmoid(gates[:, 0:H])
        f_g = jax.nn.sigmoid(gates[:, H:2 * H])
        g_g = jnp.tanh(gates[:, 2 * H:3 * H])
        o_g = jax.nn.sigmoid(gates[:, 3 * H:4 * H])
        c = f_g * c + i_g * g_g
        h = o_g * jnp.tanh(c)

        # imputation column t of the packed output (VMEM store; the single
        # output block is written back to HBM once after the kernel).
        out_ref[:, t:t + 1] = x_c

    # classifier + masked BCE-with-logits (stable formulation).
    y_h = jnp.sum(h * wout, axis=1, keepdims=True) + bout          # [Bp, 1]
    max_val = jnp.maximum(-y_h, 0.0)
    bce = (y_h - y_h * labels + max_val
           + jnp.log(jnp.exp(-max_val) + jnp.exp(-y_h - max_val)))
    y_num = jnp.sum(bce * istrain, axis=(0, 1), keepdims=True)
    y_den = jnp.sum(istrain, axis=(0, 1), keepdims=True) + 1e-5
    y_loss = y_num * pl.reciprocal(y_den, approx=True)

    loss = x_loss * impute_weight + y_loss * label_weight          # [1, 1]
    pred = jax.nn.sigmoid(y_h)                                     # [Bp, 1]

    out_ref[:, T:T + 1] = pred
    out_ref[:, T + 1:T + 2] = jnp.broadcast_to(loss, (Bp, 1))


def rits_i_forward(values, masks, deltas, evals, eval_masks, labels, is_train,
                   params, impute_weight=0.3, label_weight=1.0):
    B, T, I = values.shape
    assert I == 1, "Rits_i uses input_size = 1"
    H = params["W_decay"].shape[0]
    H4 = 4 * H
    f32 = jnp.float32
    Bp = ((B + 7) // 8) * 8                      # pad batch to sublane width (8)

    def pad_b(x):                                # [B, T] -> [Bp, T]
        return jnp.pad(x.astype(f32), ((0, Bp - B), (0, 0)))

    # one sequence slab: rows [0:Bp)=values, [Bp:2Bp)=masks, [2Bp:3Bp)=deltas
    seq_packed = jnp.concatenate(
        [pad_b(values[:, :, 0]), pad_b(masks[:, :, 0]), pad_b(deltas[:, :, 0])],
        axis=0)                                  # [3*Bp, T]

    labels1 = labels.reshape(-1).astype(f32)
    istrain1 = is_train.reshape(-1).astype(f32)
    labtr = jnp.stack([jnp.pad(labels1, (0, Bp - B)),
                       jnp.pad(istrain1, (0, Bp - B))], axis=1)    # [Bp, 2]

    # one parameter slab: [H+8, 4H]
    whh_all = jnp.transpose(params["W_hh"].astype(f32))            # [H, 4H] = W_hh^T
    wih_x = params["W_ih"][:, 0].astype(f32)                       # [4H]
    wih_m = params["W_ih"][:, 1].astype(f32)                       # [4H]
    b_all = (params["b_ih"] + params["b_hh"]).astype(f32)          # [4H]
    row_misc = jnp.concatenate([params["W_decay"][:, 0], params["b_decay"],
                                params["W_reg"][0], params["W_out"][0]]).astype(f32)
    row_scal = jnp.zeros((H4,), f32).at[0].set(params["b_reg"][0]) \
                                    .at[1].set(params["b_out"][0])
    zeros = jnp.zeros((H4,), f32)
    par_packed = jnp.concatenate(
        [whh_all,
         jnp.stack([wih_x, wih_m, b_all, row_misc, row_scal,
                    zeros, zeros, zeros], axis=0)], axis=0)        # [H+8, 4H]

    kernel = functools.partial(_rits_kernel, T, H,
                               float(impute_weight), float(label_weight))

    out = pl.pallas_call(
        kernel,
        out_shape=jax.ShapeDtypeStruct((Bp, T + 2), f32),
        grid_spec=pltpu.PrefetchScalarGridSpec(
            num_scalar_prefetch=0,
            grid=(1,),
            in_specs=[
                pl.BlockSpec((3 * Bp, T), lambda i: (0, 0)),       # sequences
                pl.BlockSpec((Bp, 2), lambda i: (0, 0)),           # labels/is_train
                pl.BlockSpec((H + 8, H4), lambda i: (0, 0)),       # packed params
            ],
            out_specs=pl.BlockSpec((Bp, T + 2), lambda i: (0, 0)),
        ),
        compiler_params=pltpu.CompilerParams(
            dimension_semantics=("arbitrary",)),
    )(seq_packed, labtr, par_packed)

    imputations = out[:B, :T].reshape(B, T, 1)
    predictions = out[:B, T:T + 1]
    loss = out[0, T + 1]
    return {
        "loss": loss,
        "predictions": predictions,
        "imputations": imputations,
        "labels": labels1.reshape(-1, 1),
        "is_train": istrain1.reshape(-1, 1),
        "evals": evals,
        "eval_masks": eval_masks,
    }


def init_params(key, H):
    stdv = 1.0 / math.sqrt(H)
    ks = jax.random.split(key, 10)
    u = lambda k, shape, s: jax.random.uniform(k, shape, jnp.float32, -s, s)
    return {
        # nn.LSTMCell(2, H)
        "W_ih": u(ks[0], (4 * H, 2), stdv),
        "W_hh": u(ks[1], (4 * H, H), stdv),
        "b_ih": u(ks[2], (4 * H,), stdv),
        "b_hh": u(ks[3], (4 * H,), stdv),
        # nn.Linear(H, 1)  (regression)
        "W_reg": u(ks[4], (1, H), stdv),
        "b_reg": u(ks[5], (1,), stdv),
        # TemporalDecay(1, H)
        "W_decay": u(ks[6], (H, 1), stdv),
        "b_decay": u(ks[7], (H,), stdv),
        # nn.Linear(H, 1)  (out)
        "W_out": u(ks[8], (1, H), stdv),
        "b_out": u(ks[9], (1,), stdv),
    }


def rits_i_reference(values, masks, deltas, labels, is_train, params, iw, lw):
    """Pure-JAX reference mirroring the PyTorch forward, for validation."""
    B, T, _ = values.shape
    H = params["W_decay"].shape[0]
    hi = jax.lax.Precision.HIGHEST
    h = jnp.zeros((B, H), jnp.float32)
    c = jnp.zeros((B, H), jnp.float32)
    x_loss = 0.0
    imput = []
    for t in range(T):
        x = values[:, t, :]
        m = masks[:, t, :]
        d = deltas[:, t, :]
        gamma = jnp.exp(-jax.nn.relu(
            jnp.dot(d, params["W_decay"].T, precision=hi) + params["b_decay"]))
        h = h * gamma
        x_h = jnp.dot(h, params["W_reg"].T, precision=hi) + params["b_reg"]
        x_c = m * x + (1.0 - m) * x_h
        x_loss = x_loss + jnp.sum(jnp.abs(x - x_h) * m) / (jnp.sum(m) + 1e-5)
        inputs = jnp.concatenate([x_c, m], axis=1)
        gates = (jnp.dot(inputs, params["W_ih"].T, precision=hi) + params["b_ih"]
                 + jnp.dot(h, params["W_hh"].T, precision=hi) + params["b_hh"])
        i_g, f_g, g_g, o_g = jnp.split(gates, 4, axis=1)
        i_g = jax.nn.sigmoid(i_g)
        f_g = jax.nn.sigmoid(f_g)
        g_g = jnp.tanh(g_g)
        o_g = jax.nn.sigmoid(o_g)
        c = f_g * c + i_g * g_g
        h = o_g * jnp.tanh(c)
        imput.append(x_c[:, None, :])
    imputations = jnp.concatenate(imput, axis=1)
    y_h = jnp.dot(h, params["W_out"].T, precision=hi) + params["b_out"]
    labels2 = labels.reshape(-1, 1)
    istrain2 = is_train.reshape(-1, 1)
    max_val = jnp.maximum(-y_h, 0.0)
    bce = (y_h - y_h * labels2 + max_val
           + jnp.log(jnp.exp(-max_val) + jnp.exp(-y_h - max_val)))
    y_loss = jnp.sum(bce * istrain2) / (jnp.sum(istrain2) + 1e-5)
    return x_loss * iw + y_loss * lw, jax.nn.sigmoid(y_h), imputations


if __name__ == "__main__":
    B, T, H = 4, 8, 32
    impute_weight, label_weight = 0.3, 1.0

    key = jax.random.PRNGKey(0)
    kp, kv, km, kd, ke, kem, kl, kt = jax.random.split(key, 8)
    params = init_params(kp, H)

    values = jax.random.normal(kv, (B, T, 1), jnp.float32)
    masks = (jax.random.uniform(km, (B, T, 1)) > 0.3).astype(jnp.float32)
    deltas = jax.random.uniform(kd, (B, T, 1), jnp.float32, 0.0, 3.0)
    evals = jax.random.normal(ke, (B, T, 1), jnp.float32)
    eval_masks = (jax.random.uniform(kem, (B, T, 1)) > 0.5).astype(jnp.float32)
    labels = (jax.random.uniform(kl, (B,)) > 0.5).astype(jnp.float32)
    is_train = (jax.random.uniform(kt, (B,)) > 0.2).astype(jnp.float32)

    out = rits_i_forward(values, masks, deltas, evals, eval_masks,
                         labels, is_train, params,
                         impute_weight, label_weight)
    jax.block_until_ready(out)

    ref_loss, ref_pred, ref_imput = rits_i_reference(
        values, masks, deltas, labels, is_train, params,
        impute_weight, label_weight)

    # loss uses approx-EUP reciprocals -> slightly looser tolerance.
    assert jnp.allclose(out["loss"], ref_loss, atol=2e-3, rtol=2e-3)
    assert jnp.allclose(out["predictions"], ref_pred, atol=1e-4, rtol=1e-4)
    assert jnp.allclose(out["imputations"], ref_imput, atol=1e-4, rtol=1e-4)

    print("KERNEL_OK")
</pallas_src>

<mosaic_0001>
module attributes {stable_mosaic.version = 11 : i64} {
  func.func @_rits_kernel(%arg0: i32, %arg1: memref<24x8xf32, #tpu.memory_space<vmem>>, %arg2: memref<8x2xf32, #tpu.memory_space<vmem>>, %arg3: memref<40x128xf32, #tpu.memory_space<vmem>>, %arg4: memref<8x10xf32, #tpu.memory_space<vmem>>) attributes {dimension_semantics = [#tpu.dimension_semantics<arbitrary>], iteration_bounds = array<i64: 1>, scalar_prefetch = 0 : i64, scratch_operands = 0 : i64, tpu.core_type = #tpu.core_type<tc>, window_params = [{pipeline_mode = #tpu.pipeline_mode<synchronous>, transform_indices = @transform_0, window_bounds = array<i64: 24, 8>}, {pipeline_mode = #tpu.pipeline_mode<synchronous>, transform_indices = @transform_1, window_bounds = array<i64: 8, 2>}, {pipeline_mode = #tpu.pipeline_mode<synchronous>, transform_indices = @transform_2, window_bounds = array<i64: 40, 128>}, {pipeline_mode = #tpu.pipeline_mode<synchronous>, transform_indices = @transform_3, window_bounds = array<i64: 8, 10>}]} {
    %c0 = arith.constant 0 : index
    %c0_0 = arith.constant 0 : index
    %0 = vector.load %arg1[%c0, %c0_0] : memref<24x8xf32, #tpu.memory_space<vmem>>, vector<24x8xf32>
    %1 = vector.extract_strided_slice %0 {offsets = [0, 0], sizes = [8, 8], strides = [1, 1]} : vector<24x8xf32> to vector<8x8xf32>
    %2 = vector.extract_strided_slice %0 {offsets = [8, 0], sizes = [8, 8], strides = [1, 1]} : vector<24x8xf32> to vector<8x8xf32>
    %3 = vector.extract_strided_slice %0 {offsets = [16, 0], sizes = [8, 8], strides = [1, 1]} : vector<24x8xf32> to vector<8x8xf32>
    %c0_1 = arith.constant 0 : index
    %c0_2 = arith.constant 0 : index
    %4 = vector.load %arg3[%c0_1, %c0_2] : memref<40x128xf32, #tpu.memory_space<vmem>>, vector<40x128xf32>
    %5 = vector.extract_strided_slice %4 {offsets = [0, 0], sizes = [32, 128], strides = [1, 1]} : vector<40x128xf32> to vector<32x128xf32>
    %6 = vector.extract_strided_slice %4 {offsets = [32, 0], sizes = [8, 128], strides = [1, 1]} : vector<40x128xf32> to vector<8x128xf32>
    %7 = vector.extract_strided_slice %6 {offsets = [0, 0], sizes = [1, 128], strides = [1, 1]} : vector<8x128xf32> to vector<1x128xf32>
    %8 = vector.extract_strided_slice %6 {offsets = [1, 0], sizes = [1, 128], strides = [1, 1]} : vector<8x128xf32> to vector<1x128xf32>
    %9 = vector.extract_strided_slice %6 {offsets = [2, 0], sizes = [1, 128], strides = [1, 1]} : vector<8x128xf32> to vector<1x128xf32>
    %10 = vector.extract_strided_slice %6 {offsets = [3, 0], sizes = [1, 128], strides = [1, 1]} : vector<8x128xf32> to vector<1x128xf32>
    %11 = vector.extract_strided_slice %10 {offsets = [0, 0], sizes = [1, 32], strides = [1, 1]} : vector<1x128xf32> to vector<1x32xf32>
    %12 = vector.extract_strided_slice %10 {offsets = [0, 32], sizes = [1, 32], strides = [1, 1]} : vector<1x128xf32> to vector<1x32xf32>
    %13 = vector.extract_strided_slice %10 {offsets = [0, 64], sizes = [1, 32], strides = [1, 1]} : vector<1x128xf32> to vector<1x32xf32>
    %14 = vector.extract_strided_slice %10 {offsets = [0, 96], sizes = [1, 32], strides = [1, 1]} : vector<1x128xf32> to vector<1x32xf32>
    %15 = vector.extract_strided_slice %6 {offsets = [4, 0], sizes = [1, 128], strides = [1, 1]} : vector<8x128xf32> to vector<1x128xf32>
    %16 = vector.extract_strided_slice %15 {offsets = [0, 0], sizes = [1, 1], strides = [1, 1]} : vector<1x128xf32> to vector<1x1xf32>
    %17 = vector.extract_strided_slice %15 {offsets = [0, 1], sizes = [1, 1], strides = [1, 1]} : vector<1x128xf32> to vector<1x1xf32>
    %c0_3 = arith.constant 0 : index
    %c0_4 = arith.constant 0 : index
    %18 = vector.load %arg2[%c0_3, %c0_4] : memref<8x2xf32, #tpu.memory_space<vmem>>, vector<8x1xf32>
    %c0_5 = arith.constant 0 : index
    %c1 = arith.constant 1 : index
    %19 = vector.load %arg2[%c0_5, %c1] : memref<8x2xf32, #tpu.memory_space<vmem>>, vector<8x1xf32>
    %cst = arith.constant 0.000000e+00 : f32
    %20 = vector.broadcast %cst : f32 to vector<8x32xf32>
    %cst_6 = arith.constant 0.000000e+00 : f32
    %21 = vector.broadcast %cst_6 : f32 to vector<8x32xf32>
    %cst_7 = arith.constant 0.000000e+00 : f32
    %22 = vector.broadcast %cst_7 : f32 to vector<1x1xf32>
    %23 = vector.extract_strided_slice %1 {offsets = [0, 0], sizes = [8, 1], strides = [1, 1]} : vector<8x8xf32> to vector<8x1xf32>
    %24 = vector.extract_strided_slice %2 {offsets = [0, 0], sizes = [8, 1], strides = [1, 1]} : vector<8x8xf32> to vector<8x1xf32>
    %25 = vector.extract_strided_slice %3 {offsets = [0, 0], sizes = [8, 1], strides = [1, 1]} : vector<8x8xf32> to vector<8x1xf32>
    %26 = vector.broadcast %25 : vector<8x1xf32> to vector<8x32xf32>
    %27 = vector.broadcast %11 : vector<1x32xf32> to vector<8x32xf32>
    %28 = arith.mulf %26, %27 : vector<8x32xf32>
    %29 = vector.broadcast %12 : vector<1x32xf32> to vector<8x32xf32>
    %30 = arith.addf %28, %29 : vector<8x32xf32>
    %cst_8 = arith.constant 0.000000e+00 : f32
    %31 = vector.broadcast %cst_8 : f32 to vector<8x32xf32>
    %32 = arith.maximumf %30, %31 : vector<8x32xf32>
    %cst_9 = arith.constant 0.000000e+00 : f32
    %33 = vector.broadcast %cst_9 : f32 to vector<8x32xf32>
    %34 = arith.subf %33, %32 : vector<8x32xf32>
    %35 = math.exp %34 : vector<8x32xf32>
    %36 = arith.mulf %20, %35 : vector<8x32xf32>
    %37 = vector.broadcast %13 : vector<1x32xf32> to vector<8x32xf32>
    %38 = arith.mulf %36, %37 : vector<8x32xf32>
    %cst_10 = arith.constant dense<0.000000e+00> : vector<8xf32>
    %39 = vector.multi_reduction <add>, %38, %cst_10 [1] : vector<8x32xf32> to vector<8xf32>
    %40 = vector.shape_cast %39 : vector<8xf32> to vector<8x1xf32>
    %41 = vector.broadcast %16 : vector<1x1xf32> to vector<8x1xf32>
    %42 = arith.addf %40, %41 : vector<8x1xf32>
    %43 = arith.mulf %24, %23 : vector<8x1xf32>
    %cst_11 = arith.constant 1.000000e+00 : f32
    %44 = vector.broadcast %cst_11 : f32 to vector<8x1xf32>
    %45 = arith.subf %44, %24 : vector<8x1xf32>
    %46 = arith.mulf %45, %42 : vector<8x1xf32>
    %47 = arith.addf %43, %46 : vector<8x1xf32>
    %48 = arith.subf %23, %42 : vector<8x1xf32>
    %49 = math.absf %48 : vector<8x1xf32>
    %50 = arith.mulf %49, %24 : vector<8x1xf32>
    %51 = vector.shape_cast %50 : vector<8x1xf32> to vector<1x8x1xf32>
    %cst_12 = arith.constant dense<0.000000e+00> : vector<1xf32>
    %52 = vector.multi_reduction <add>, %51, %cst_12 [1, 2] : vector<1x8x1xf32> to vector<1xf32>
    %53 = vector.shape_cast %52 : vector<1xf32> to vector<1x1x1xf32>
    %54 = vector.extract %53[0, 0, 0] : f32 from vector<1x1x1xf32>
    %55 = vector.broadcast %54 : f32 to vector<1x1xf32>
    %56 = vector.shape_cast %24 : vector<8x1xf32> to vector<1x8x1xf32>
    %cst_13 = arith.constant dense<0.000000e+00> : vector<1xf32>
    %57 = vector.multi_reduction <add>, %56, %cst_13 [1, 2] : vector<1x8x1xf32> to vector<1xf32>
    %58 = vector.shape_cast %57 : vector<1xf32> to vector<1x1x1xf32>
    %59 = vector.extract %58[0, 0, 0] : f32 from vector<1x1x1xf32>
    %60 = vector.broadcast %59 : f32 to vector<1x1xf32>
    %cst_14 = arith.constant 9.99999974E-6 : f32
    %61 = vector.broadcast %cst_14 : f32 to vector<1x1xf32>
    %62 = arith.addf %60, %61 : vector<1x1xf32>
    %63 = tpu.reciprocal %62 {approx = true} : vector<1x1xf32> -> vector<1x1xf32>
    %64 = arith.mulf %55, %63 : vector<1x1xf32>
    %65 = arith.addf %22, %64 : vector<1x1xf32>
    %66 = vector.broadcast %47 : vector<8x1xf32> to vector<8x128xf32>
    %67 = vector.broadcast %7 : vector<1x128xf32> to vector<8x128xf32>
    %68 = arith.mulf %66, %67 : vector<8x128xf32>
    %69 = vector.broadcast %24 : vector<8x1xf32> to vector<8x128xf32>
    %70 = vector.broadcast %8 : vector<1x128xf32> to vector<8x128xf32>
    %71 = arith.mulf %69, %70 : vector<8x128xf32>
    %72 = arith.addf %68, %71 : vector<8x128xf32>
    %cst_15 = arith.constant dense<0.000000e+00> : vector<8x128xf32>
    %73 = tpu.matmul %36, %5, %cst_15 {dimension_numbers = #tpu.dot_dimension_numbers<[1], [0], [0], [1], [0, 0, 1, 1], [], []>} : vector<8x32xf32>, vector<32x128xf32>, vector<8x128xf32> -> vector<8x128xf32>
    %74 = arith.addf %72, %73 : vector<8x128xf32>
    %75 = vector.broadcast %9 : vector<1x128xf32> to vector<8x128xf32>
    %76 = arith.addf %74, %75 : vector<8x128xf32>
    %77 = vector.extract_strided_slice %76 {offsets = [0, 0], sizes = [8, 32], strides = [1, 1]} : vector<8x128xf32> to vector<8x32xf32>
    %78 = arith.negf %77 : vector<8x32xf32>
    %79 = math.exp %78 : vector<8x32xf32>
    %cst_16 = arith.constant 1.000000e+00 : f32
    %80 = vector.broadcast %cst_16 : f32 to vector<8x32xf32>
    %81 = arith.addf %80, %79 : vector<8x32xf32>
    %82 = arith.divf %80, %81 : vector<8x32xf32>
    %83 = vector.extract_strided_slice %76 {offsets = [0, 32], sizes = [8, 32], strides = [1, 1]} : vector<8x128xf32> to vector<8x32xf32>
    %84 = arith.negf %83 : vector<8x32xf32>
    %85 = math.exp %84 : vector<8x32xf32>
    %cst_17 = arith.constant 1.000000e+00 : f32
    %86 = vector.broadcast %cst_17 : f32 to vector<8x32xf32>
    %87 = arith.addf %86, %85 : vector<8x32xf32>
    %88 = arith.divf %86, %87 : vector<8x32xf32>
    %89 = vector.extract_strided_slice %76 {offsets = [0, 64], sizes = [8, 32], strides = [1, 1]} : vector<8x128xf32> to vector<8x32xf32>
    %90 = math.tanh %89 : vector<8x32xf32>
    %91 = vector.extract_strided_slice %76 {offsets = [0, 96], sizes = [8, 32], strides = [1, 1]} : vector<8x128xf32> to vector<8x32xf32>
    %92 = arith.negf %91 : vector<8x32xf32>
    %93 = math.exp %92 : vector<8x32xf32>
    %cst_18 = arith.constant 1.000000e+00 : f32
    %94 = vector.broadcast %cst_18 : f32 to vector<8x32xf32>
    %95 = arith.addf %94, %93 : vector<8x32xf32>
    %96 = arith.divf %94, %95 : vector<8x32xf32>
    %97 = arith.mulf %88, %21 : vector<8x32xf32>
    %98 = arith.mulf %82, %90 : vector<8x32xf32>
    %99 = arith.addf %97, %98 : vector<8x32xf32>
    %100 = math.tanh %99 : vector<8x32xf32>
    %101 = arith.mulf %96, %100 : vector<8x32xf32>
    %c0_19 = arith.constant 0 : index
    %c0_20 = arith.constant 0 : index
    %102 = vector.load %arg4[%c0_19, %c0_20] : memref<8x10xf32, #tpu.memory_space<vmem>>, vector<8x1xf32>
    tpu.vector_store %arg4[%c0_19, %c0_20], %47 {strides = array<i32>} : memref<8x10xf32, #tpu.memory_space<vmem>>, vector<8x1xf32>,
    %103 = vector.extract_strided_slice %1 {offsets = [0, 1], sizes = [8, 1], strides = [1, 1]} : vector<8x8xf32> to vector<8x1xf32>
    %104 = vector.extract_strided_slice %2 {offsets = [0, 1], sizes = [8, 1], strides = [1, 1]} : vector<8x8xf32> to vector<8x1xf32>
    %105 = vector.extract_strided_slice %3 {offsets = [0, 1], sizes = [8, 1], strides = [1, 1]} : vector<8x8xf32> to vector<8x1xf32>
    %106 = vector.broadcast %105 : vector<8x1xf32> to vector<8x32xf32>
    %107 = vector.broadcast %11 : vector<1x32xf32> to vector<8x32xf32>
    %108 = arith.mulf %106, %107 : vector<8x32xf32>
    %109 = vector.broadcast %12 : vector<1x32xf32> to vector<8x32xf32>
    %110 = arith.addf %108, %109 : vector<8x32xf32>
    %cst_21 = arith.constant 0.000000e+00 : f32
    %111 = vector.broadcast %cst_21 : f32 to vector<8x32xf32>
    %112 = arith.maximumf %110, %111 : vector<8x32xf32>
    %cst_22 = arith.constant 0.000000e+00 : f32
    %113 = vector.broadcast %cst_22 : f32 to vector<8x32xf32>
    %114 = arith.subf %113, %112 : vector<8x32xf32>
    %115 = math.exp %114 : vector<8x32xf32>
    %116 = arith.mulf %101, %115 : vector<8x32xf32>
    %117 = vector.broadcast %13 : vector<1x32xf32> to vector<8x32xf32>
    %118 = arith.mulf %116, %117 : vector<8x32xf32>
    %cst_23 = arith.constant dense<0.000000e+00> : vector<8xf32>
    %119 = vector.multi_reduction <add>, %118, %cst_23 [1] : vector<8x32xf32> to vector<8xf32>
    %120 = vector.shape_cast %119 : vector<8xf32> to vector<8x1xf32>
    %121 = vector.broadcast %16 : vector<1x1xf32> to vector<8x1xf32>
    %122 = arith.addf %120, %121 : vector<8x1xf32>
    %123 = arith.mulf %104, %103 : vector<8x1xf32>
    %cst_24 = arith.constant 1.000000e+00 : f32
    %124 = vector.broadcast %cst_24 : f32 to vector<8x1xf32>
    %125 = arith.subf %124, %104 : vector<8x1xf32>
    %126 = arith.mulf %125, %122 : vector<8x1xf32>
    %127 = arith.addf %123, %126 : vector<8x1xf32>
    %128 = arith.subf %103, %122 : vector<8x1xf32>
    %129 = math.absf %128 : vector<8x1xf32>
    %130 = arith.mulf %129, %104 : vector<8x1xf32>
    %131 = vector.shape_cast %130 : vector<8x1xf32> to vector<1x8x1xf32>
    %cst_25 = arith.constant dense<0.000000e+00> : vector<1xf32>
    %132 = vector.multi_reduction <add>, %131, %cst_25 [1, 2] : vector<1x8x1xf32> to vector<1xf32>
    %133 = vector.shape_cast %132 : vector<1xf32> to vector<1x1x1xf32>
    %134 = vector.extract %133[0, 0, 0] : f32 from vector<1x1x1xf32>
    %135 = vector.broadcast %134 : f32 to vector<1x1xf32>
    %136 = vector.shape_cast %104 : vector<8x1xf32> to vector<1x8x1xf32>
    %cst_26 = arith.constant dense<0.000000e+00> : vector<1xf32>
    %137 = vector.multi_reduction <add>, %136, %cst_26 [1, 2] : vector<1x8x1xf32> to vector<1xf32>
    %138 = vector.shape_cast %137 : vector<1xf32> to vector<1x1x1xf32>
    %139 = vector.extract %138[0, 0, 0] : f32 from vector<1x1x1xf32>
    %140 = vector.broadcast %139 : f32 to vector<1x1xf32>
    %cst_27 = arith.constant 9.99999974E-6 : f32
    %141 = vector.broadcast %cst_27 : f32 to vector<1x1xf32>
    %142 = arith.addf %140, %141 : vector<1x1xf32>
    %143 = tpu.reciprocal %142 {approx = true} : vector<1x1xf32> -> vector<1x1xf32>
    %144 = arith.mulf %135, %143 : vector<1x1xf32>
    %145 = arith.addf %65, %144 : vector<1x1xf32>
    %146 = vector.broadcast %127 : vector<8x1xf32> to vector<8x128xf32>
    %147 = vector.broadcast %7 : vector<1x128xf32> to vector<8x128xf32>
    %148 = arith.mulf %146, %147 : vector<8x128xf32>
    %149 = vector.broadcast %104 : vector<8x1xf32> to vector<8x128xf32>
    %150 = vector.broadcast %8 : vector<1x128xf32> to vector<8x128xf32>
    %151 = arith.mulf %149, %150 : vector<8x128xf32>
    %152 = arith.addf %148, %151 : vector<8x128xf32>
    %cst_28 = arith.constant dense<0.000000e+00> : vector<8x128xf32>
    %153 = tpu.matmul %116, %5, %cst_28 {dimension_numbers = #tpu.dot_dimension_numbers<[1], [0], [0], [1], [0, 0, 1, 1], [], []>} : vector<8x32xf32>, vector<32x128xf32>, vector<8x128xf32> -> vector<8x128xf32>
    %154 = arith.addf %152, %153 : vector<8x128xf32>
    %155 = vector.broadcast %9 : vector<1x128xf32> to vector<8x128xf32>
    %156 = arith.addf %154, %155 : vector<8x128xf32>
    %157 = vector.extract_strided_slice %156 {offsets = [0, 0], sizes = [8, 32], strides = [1, 1]} : vector<8x128xf32> to vector<8x32xf32>
    %158 = arith.negf %157 : vector<8x32xf32>
    %159 = math.exp %158 : vector<8x32xf32>
    %cst_29 = arith.constant 1.000000e+00 : f32
    %160 = vector.broadcast %cst_29 : f32 to vector<8x32xf32>
    %161 = arith.addf %160, %159 : vector<8x32xf32>
    %162 = arith.divf %160, %161 : vector<8x32xf32>
    %163 = vector.extract_strided_slice %156 {offsets = [0, 32], sizes = [8, 32], strides = [1, 1]} : vector<8x128xf32> to vector<8x32xf32>
    %164 = arith.negf %163 : vector<8x32xf32>
    %165 = math.exp %164 : vector<8x32xf32>
    %cst_30 = arith.constant 1.000000e+00 : f32
    %166 = vector.broadcast %cst_30 : f32 to vector<8x32xf32>
    %167 = arith.addf %166, %165 : vector<8x32xf32>
    %168 = arith.divf %166, %167 : vector<8x32xf32>
    %169 = vector.extract_strided_slice %156 {offsets = [0, 64], sizes = [8, 32], strides = [1, 1]} : vector<8x128xf32> to vector<8x32xf32>
    %170 = math.tanh %169 : vector<8x32xf32>
    %171 = vector.extract_strided_slice %156 {offsets = [0, 96], sizes = [8, 32], strides = [1, 1]} : vector<8x128xf32> to vector<8x32xf32>
    %172 = arith.negf %171 : vector<8x32xf32>
    %173 = math.exp %172 : vector<8x32xf32>
    %cst_31 = arith.constant 1.000000e+00 : f32
    %174 = vector.broadcast %cst_31 : f32 to vector<8x32xf32>
    %175 = arith.addf %174, %173 : vector<8x32xf32>
    %176 = arith.divf %174, %175 : vector<8x32xf32>
    %177 = arith.mulf %168, %99 : vector<8x32xf32>
    %178 = arith.mulf %162, %170 : vector<8x32xf32>
    %179 = arith.addf %177, %178 : vector<8x32xf32>
    %180 = math.tanh %179 : vector<8x32xf32>
    %181 = arith.mulf %176, %180 : vector<8x32xf32>
    %c0_32 = arith.constant 0 : index
    %c1_33 = arith.constant 1 : index
    %182 = vector.load %arg4[%c0_32, %c1_33] : memref<8x10xf32, #tpu.memory_space<vmem>>, vector<8x1xf32>
    tpu.vector_store %arg4[%c0_32, %c1_33], %127 {strides = array<i32>} : memref<8x10xf32, #tpu.memory_space<vmem>>, vector<8x1xf32>,
    %183 = vector.extract_strided_slice %1 {offsets = [0, 2], sizes = [8, 1], strides = [1, 1]} : vector<8x8xf32> to vector<8x1xf32>
    %184 = vector.extract_strided_slice %2 {offsets = [0, 2], sizes = [8, 1], strides = [1, 1]} : vector<8x8xf32> to vector<8x1xf32>
    %185 = vector.extract_strided_slice %3 {offsets = [0, 2], sizes = [8, 1], strides = [1, 1]} : vector<8x8xf32> to vector<8x1xf32>
    %186 = vector.broadcast %185 : vector<8x1xf32> to vector<8x32xf32>
    %187 = vector.broadcast %11 : vector<1x32xf32> to vector<8x32xf32>
    %188 = arith.mulf %186, %187 : vector<8x32xf32>
    %189 = vector.broadcast %12 : vector<1x32xf32> to vector<8x32xf32>
    %190 = arith.addf %188, %189 : vector<8x32xf32>
    %cst_34 = arith.constant 0.000000e+00 : f32
    %191 = vector.broadcast %cst_34 : f32 to vector<8x32xf32>
    %192 = arith.maximumf %190, %191 : vector<8x32xf32>
    %cst_35 = arith.constant 0.000000e+00 : f32
    %193 = vector.broadcast %cst_35 : f32 to vector<8x32xf32>
    %194 = arith.subf %193, %192 : vector<8x32xf32>
    %195 = math.exp %194 : vector<8x32xf32>
    %196 = arith.mulf %181, %195 : vector<8x32xf32>
    %197 = vector.broadcast %13 : vector<1x32xf32> to vector<8x32xf32>
    %198 = arith.mulf %196, %197 : vector<8x32xf32>
    %cst_36 = arith.constant dense<0.000000e+00> : vector<8xf32>
    %199 = vector.multi_reduction <add>, %198, %cst_36 [1] : vector<8x32xf32> to vector<8xf32>
    %200 = vector.shape_cast %199 : vector<8xf32> to vector<8x1xf32>
    %201 = vector.broadcast %16 : vector<1x1xf32> to vector<8x1xf32>
    %202 = arith.addf %200, %201 : vector<8x1xf32>
    %203 = arith.mulf %184, %183 : vector<8x1xf32>
    %cst_37 = arith.constant 1.000000e+00 : f32
    %204 = vector.broadcast %cst_37 : f32 to vector<8x1xf32>
    %205 = arith.subf %204, %184 : vector<8x1xf32>
    %206 = arith.mulf %205, %202 : vector<8x1xf32>
    %207 = arith.addf %203, %206 : vector<8x1xf32>
    %208 = arith.subf %183, %202 : vector<8x1xf32>
    %209 = math.absf %208 : vector<8x1xf32>
    %210 = arith.mulf %209, %184 : vector<8x1xf32>
    %211 = vector.shape_cast %210 : vector<8x1xf32> to vector<1x8x1xf32>
    %cst_38 = arith.constant dense<0.000000e+00> : vector<1xf32>
    %212 = vector.multi_reduction <add>, %211, %cst_38 [1, 2] : vector<1x8x1xf32> to vector<1xf32>
    %213 = vector.shape_cast %212 : vector<1xf32> to vector<1x1x1xf32>
    %214 = vector.extract %213[0, 0, 0] : f32 from vector<1x1x1xf32>
    %215 = vector.broadcast %214 : f32 to vector<1x1xf32>
    %216 = vector.shape_cast %184 : vector<8x1xf32> to vector<1x8x1xf32>
    %cst_39 = arith.constant dense<0.000000e+00> : vector<1xf32>
    %217 = vector.multi_reduction <add>, %216, %cst_39 [1, 2] : vector<1x8x1xf32> to vector<1xf32>
    %218 = vector.shape_cast %217 : vector<1xf32> to vector<1x1x1xf32>
    %219 = vector.extract %218[0, 0, 0] : f32 from vector<1x1x1xf32>
    %220 = vector.broadcast %219 : f32 to vector<1x1xf32>
    %cst_40 = arith.constant 9.99999974E-6 : f32
    %221 = vector.broadcast %cst_40 : f32 to vector<1x1xf32>
    %222 = arith.addf %220, %221 : vector<1x1xf32>
    %223 = tpu.reciprocal %222 {approx = true} : vector<1x1xf32> -> vector<1x1xf32>
    %224 = arith.mulf %215, %223 : vector<1x1xf32>
    %225 = arith.addf %145, %224 : vector<1x1xf32>
    %226 = vector.broadcast %207 : vector<8x1xf32> to vector<8x128xf32>
    %227 = vector.broadcast %7 : vector<1x128xf32> to vector<8x128xf32>
    %228 = arith.mulf %226, %227 : vector<8x128xf32>
    %229 = vector.broadcast %184 : vector<8x1xf32> to vector<8x128xf32>
    %230 = vector.broadcast %8 : vector<1x128xf32> to vector<8x128xf32>
    %231 = arith.mulf %229, %230 : vector<8x128xf32>
    %232 = arith.addf %228, %231 : vector<8x128xf32>
    %cst_41 = arith.constant dense<0.000000e+00> : vector<8x128xf32>
    %233 = tpu.matmul %196, %5, %cst_41 {dimension_numbers = #tpu.dot_dimension_numbers<[1], [0], [0], [1], [0, 0, 1, 1], [], []>} : vector<8x32xf32>, vector<32x128xf32>, vector<8x128xf32> -> vector<8x128xf32>
    %234 = arith.addf %232, %233 : vector<8x128xf32>
    %235 = vector.broadcast %9 : vector<1x128xf32> to vector<8x128xf32>
    %236 = arith.addf %234, %235 : vector<8x128xf32>
    %237 = vector.extract_strided_slice %236 {offsets = [0, 0], sizes = [8, 32], strides = [1, 1]} : vector<8x128xf32> to vector<8x32xf32>
    %238 = arith.negf %237 : vector<8x32xf32>
    %239 = math.exp %238 : vector<8x32xf32>
    %cst_42 = arith.constant 1.000000e+00 : f32
    %240 = vector.broadcast %cst_42 : f32 to vector<8x32xf32>
    %241 = arith.addf %240, %239 : vector<8x32xf32>
    %242 = arith.divf %240, %241 : vector<8x32xf32>
    %243 = vector.extract_strided_slice %236 {offsets = [0, 32], sizes = [8, 32], strides = [1, 1]} : vector<8x128xf32> to vector<8x32xf32>
    %244 = arith.negf %243 : vector<8x32xf32>
    %245 = math.exp %244 : vector<8x32xf32>
    %cst_43 = arith.constant 1.000000e+00 : f32
    %246 = vector.broadcast %cst_43 : f32 to vector<8x32xf32>
    %247 = arith.addf %246, %245 : vector<8x32xf32>
    %248 = arith.divf %246, %247 : vector<8x32xf32>
    %249 = vector.extract_strided_slice %236 {offsets = [0, 64], sizes = [8, 32], strides = [1, 1]} : vector<8x128xf32> to vector<8x32xf32>
    %250 = math.tanh %249 : vector<8x32xf32>
    %251 = vector.extract_strided_slice %236 {offsets = [0, 96], sizes = [8, 32], strides = [1, 1]} : vector<8x128xf32> to vector<8x32xf32>
    %252 = arith.negf %251 : vector<8x32xf32>
    %253 = math.exp %252 : vector<8x32xf32>
    %cst_44 = arith.constant 1.000000e+00 : f32
    %254 = vector.broadcast %cst_44 : f32 to vector<8x32xf32>
    %255 = arith.addf %254, %253 : vector<8x32xf32>
    %256 = arith.divf %254, %255 : vector<8x32xf32>
    %257 = arith.mulf %248, %179 : vector<8x32xf32>
    %258 = arith.mulf %242, %250 : vector<8x32xf32>
    %259 = arith.addf %257, %258 : vector<8x32xf32>
    %260 = math.tanh %259 : vector<8x32xf32>
    %261 = arith.mulf %256, %260 : vector<8x32xf32>
    %c0_45 = arith.constant 0 : index
    %c2 = arith.constant 2 : index
    %262 = vector.load %arg4[%c0_45, %c2] : memref<8x10xf32, #tpu.memory_space<vmem>>, vector<8x1xf32>
    tpu.vector_store %arg4[%c0_45, %c2], %207 {strides = array<i32>} : memref<8x10xf32, #tpu.memory_space<vmem>>, vector<8x1xf32>,
    %263 = vector.extract_strided_slice %1 {offsets = [0, 3], sizes = [8, 1], strides = [1, 1]} : vector<8x8xf32> to vector<8x1xf32>
    %264 = vector.extract_strided_slice %2 {offsets = [0, 3], sizes = [8, 1], strides = [1, 1]} : vector<8x8xf32> to vector<8x1xf32>
    %265 = vector.extract_strided_slice %3 {offsets = [0, 3], sizes = [8, 1], strides = [1, 1]} : vector<8x8xf32> to vector<8x1xf32>
    %266 = vector.broadcast %265 : vector<8x1xf32> to vector<8x32xf32>
    %267 = vector.broadcast %11 : vector<1x32xf32> to vector<8x32xf32>
    %268 = arith.mulf %266, %267 : vector<8x32xf32>
    %269 = vector.broadcast %12 : vector<1x32xf32> to vector<8x32xf32>
    %270 = arith.addf %268, %269 : vector<8x32xf32>
    %cst_46 = arith.constant 0.000000e+00 : f32
    %271 = vector.broadcast %cst_46 : f32 to vector<8x32xf32>
    %272 = arith.maximumf %270, %271 : vector<8x32xf32>
    %cst_47 = arith.constant 0.000000e+00 : f32
    %273 = vector.broadcast %cst_47 : f32 to vector<8x32xf32>
    %274 = arith.subf %273, %272 : vector<8x32xf32>
    %275 = math.exp %274 : vector<8x32xf32>
    %276 = arith.mulf %261, %275 : vector<8x32xf32>
    %277 = vector.broadcast %13 : vector<1x32xf32> to vector<8x32xf32>
    %278 = arith.mulf %276, %277 : vector<8x32xf32>
    %cst_48 = arith.constant dense<0.000000e+00> : vector<8xf32>
    %279 = vector.multi_reduction <add>, %278, %cst_48 [1] : vector<8x32xf32> to vector<8xf32>
    %280 = vector.shape_cast %279 : vector<8xf32> to vector<8x1xf32>
    %281 = vector.broadcast %16 : vector<1x1xf32> to vector<8x1xf32>
    %282 = arith.addf %280, %281 : vector<8x1xf32>
    %283 = arith.mulf %264, %263 : vector<8x1xf32>
    %cst_49 = arith.constant 1.000000e+00 : f32
    %284 = vector.broadcast %cst_49 : f32 to vector<8x1xf32>
    %285 = arith.subf %284, %264 : vector<8x1xf32>
    %286 = arith.mulf %285, %282 : vector<8x1xf32>
    %287 = arith.addf %283, %286 : vector<8x1xf32>
    %288 = arith.subf %263, %282 : vector<8x1xf32>
    %289 = math.absf %288 : vector<8x1xf32>
    %290 = arith.mulf %289, %264 : vector<8x1xf32>
    %291 = vector.shape_cast %290 : vector<8x1xf32> to vector<1x8x1xf32>
    %cst_50 = arith.constant dense<0.000000e+00> : vector<1xf32>
    %292 = vector.multi_reduction <add>, %291, %cst_50 [1, 2] : vector<1x8x1xf32> to vector<1xf32>
    %293 = vector.shape_cast %292 : vector<1xf32> to vector<1x1x1xf32>
    %294 = vector.extract %293[0, 0, 0] : f32 from vector<1x1x1xf32>
    %295 = vector.broadcast %294 : f32 to vector<1x1xf32>
    %296 = vector.shape_cast %264 : vector<8x1xf32> to vector<1x8x1xf32>
    %cst_51 = arith.constant dense<0.000000e+00> : vector<1xf32>
    %297 = vector.multi_reduction <add>, %296, %cst_51 [1, 2] : vector<1x8x1xf32> to vector<1xf32>
    %298 = vector.shape_cast %297 : vector<1xf32> to vector<1x1x1xf32>
    %299 = vector.extract %298[0, 0, 0] : f32 from vector<1x1x1xf32>
    %300 = vector.broadcast %299 : f32 to vector<1x1xf32>
    %cst_52 = arith.constant 9.99999974E-6 : f32
    %301 = vector.broadcast %cst_52 : f32 to vector<1x1xf32>
    %302 = arith.addf %300, %301 : vector<1x1xf32>
    %303 = tpu.reciprocal %302 {approx = true} : vector<1x1xf32> -> vector<1x1xf32>
    %304 = arith.mulf %295, %303 : vector<1x1xf32>
    %305 = arith.addf %225, %304 : vector<1x1xf32>
    %306 = vector.broadcast %287 : vector<8x1xf32> to vector<8x128xf32>
    %307 = vector.broadcast %7 : vector<1x128xf32> to vector<8x128xf32>
    %308 = arith.mulf %306, %307 : vector<8x128xf32>
    %309 = vector.broadcast %264 : vector<8x1xf32> to vector<8x128xf32>
    %310 = vector.broadcast %8 : vector<1x128xf32> to vector<8x128xf32>
    %311 = arith.mulf %309, %310 : vector<8x128xf32>
    %312 = arith.addf %308, %311 : vector<8x128xf32>
    %cst_53 = arith.constant dense<0.000000e+00> : vector<8x128xf32>
    %313 = tpu.matmul %276, %5, %cst_53 {dimension_numbers = #tpu.dot_dimension_numbers<[1], [0], [0], [1], [0, 0, 1, 1], [], []>} : vector<8x32xf32>, vector<32x128xf32>, vector<8x128xf32> -> vector<8x128xf32>
    %314 = arith.addf %312, %313 : vector<8x128xf32>
    %315 = vector.broadcast %9 : vector<1x128xf32> to vector<8x128xf32>
    %316 = arith.addf %314, %315 : vector<8x128xf32>
    %317 = vector.extract_strided_slice %316 {offsets = [0, 0], sizes = [8, 32], strides = [1, 1]} : vector<8x128xf32> to vector<8x32xf32>
    %318 = arith.negf %317 : vector<8x32xf32>
    %319 = math.exp %318 : vector<8x32xf32>
    %cst_54 = arith.constant 1.000000e+00 : f32
    %320 = vector.broadcast %cst_54 : f32 to vector<8x32xf32>
    %321 = arith.addf %320, %319 : vector<8x32xf32>
    %322 = arith.divf %320, %321 : vector<8x32xf32>
    %323 = vector.extract_strided_slice %316 {offsets = [0, 32], sizes = [8, 32], strides = [1, 1]} : vector<8x128xf32> to vector<8x32xf32>
    %324 = arith.negf %323 : vector<8x32xf32>
    %325 = math.exp %324 : vector<8x32xf32>
    %cst_55 = arith.constant 1.000000e+00 : f32
    %326 = vector.broadcast %cst_55 : f32 to vector<8x32xf32>
    %327 = arith.addf %326, %325 : vector<8x32xf32>
    %328 = arith.divf %326, %327 : vector<8x32xf32>
    %329 = vector.extract_strided_slice %316 {offsets = [0, 64], sizes = [8, 32], strides = [1, 1]} : vector<8x128xf32> to vector<8x32xf32>
    %330 = math.tanh %329 : vector<8x32xf32>
    %331 = vector.extract_strided_slice %316 {offsets = [0, 96], sizes = [8, 32], strides = [1, 1]} : vector<8x128xf32> to vector<8x32xf32>
    %332 = arith.negf %331 : vector<8x32xf32>
    %333 = math.exp %332 : vector<8x32xf32>
    %cst_56 = arith.constant 1.000000e+00 : f32
    %334 = vector.broadcast %cst_56 : f32 to vector<8x32xf32>
    %335 = arith.addf %334, %333 : vector<8x32xf32>
    %336 = arith.divf %334, %335 : vector<8x32xf32>
    %337 = arith.mulf %328, %259 : vector<8x32xf32>
    %338 = arith.mulf %322, %330 : vector<8x32xf32>
    %339 = arith.addf %337, %338 : vector<8x32xf32>
    %340 = math.tanh %339 : vector<8x32xf32>
    %341 = arith.mulf %336, %340 : vector<8x32xf32>
    %c0_57 = arith.constant 0 : index
    %c3 = arith.constant 3 : index
    %342 = vector.load %arg4[%c0_57, %c3] : memref<8x10xf32, #tpu.memory_space<vmem>>, vector<8x1xf32>
    tpu.vector_store %arg4[%c0_57, %c3], %287 {strides = array<i32>} : memref<8x10xf32, #tpu.memory_space<vmem>>, vector<8x1xf32>,
    %343 = vector.extract_strided_slice %1 {offsets = [0, 4], sizes = [8, 1], strides = [1, 1]} : vector<8x8xf32> to vector<8x1xf32>
    %344 = vector.extract_strided_slice %2 {offsets = [0, 4], sizes = [8, 1], strides = [1, 1]} : vector<8x8xf32> to vector<8x1xf32>
    %345 = vector.extract_strided_slice %3 {offsets = [0, 4], sizes = [8, 1], strides = [1, 1]} : vector<8x8xf32> to vector<8x1xf32>
    %346 = vector.broadcast %345 : vector<8x1xf32> to vector<8x32xf32>
    %347 = vector.broadcast %11 : vector<1x32xf32> to vector<8x32xf32>
    %348 = arith.mulf %346, %347 : vector<8x32xf32>
    %349 = vector.broadcast %12 : vector<1x32xf32> to vector<8x32xf32>
    %350 = arith.addf %348, %349 : vector<8x32xf32>
    %cst_58 = arith.constant 0.000000e+00 : f32
    %351 = vector.broadcast %cst_58 : f32 to vector<8x32xf32>
    %352 = arith.maximumf %350, %351 : vector<8x32xf32>
    %cst_59 = arith.constant 0.000000e+00 : f32
    %353 = vector.broadcast %cst_59 : f32 to vector<8x32xf32>
    %354 = arith.subf %353, %352 : vector<8x32xf32>
    %355 = math.exp %354 : vector<8x32xf32>
    %356 = arith.mulf %341, %355 : vector<8x32xf32>
    %357 = vector.broadcast %13 : vector<1x32xf32> to vector<8x32xf32>
    %358 = arith.mulf %356, %357 : vector<8x32xf32>
    %cst_60 = arith.constant dense<0.000000e+00> : vector<8xf32>
    %359 = vector.multi_reduction <add>, %358, %cst_60 [1] : vector<8x32xf32> to vector<8xf32>
    %360 = vector.shape_cast %359 : vector<8xf32> to vector<8x1xf32>
    %361 = vector.broadcast %16 : vector<1x1xf32> to vector<8x1xf32>
    %362 = arith.addf %360, %361 : vector<8x1xf32>
    %363 = arith.mulf %344, %343 : vector<8x1xf32>
    %cst_61 = arith.constant 1.000000e+00 : f32
    %364 = vector.broadcast %cst_61 : f32 to vector<8x1xf32>
    %365 = arith.subf %364, %344 : vector<8x1xf32>
    %366 = arith.mulf %365, %362 : vector<8x1xf32>
    %367 = arith.addf %363, %366 : vector<8x1xf32>
    %368 = arith.subf %343, %362 : vector<8x1xf32>
    %369 = math.absf %368 : vector<8x1xf32>
    %370 = arith.mulf %369, %344 : vector<8x1xf32>
    %371 = vector.shape_cast %370 : vector<8x1xf32> to vector<1x8x1xf32>
    %cst_62 = arith.constant dense<0.000000e+00> : vector<1xf32>
    %372 = vector.multi_reduction <add>, %371, %cst_62 [1, 2] : vector<1x8x1xf32> to vector<1xf32>
    %373 = vector.shape_cast %372 : vector<1xf32> to vector<1x1x1xf32>
    %374 = vector.extract %373[0, 0, 0] : f32 from vector<1x1x1xf32>
    %375 = vector.broadcast %374 : f32 to vector<1x1xf32>
    %376 = vector.shape_cast %344 : vector<8x1xf32> to vector<1x8x1xf32>
    %cst_63 = arith.constant dense<0.000000e+00> : vector<1xf32>
    %377 = vector.multi_reduction <add>, %376, %cst_63 [1, 2] : vector<1x8x1xf32> to vector<1xf32>
    %378 = vector.shape_cast %377 : vector<1xf32> to vector<1x1x1xf32>
    %379 = vector.extract %378[0, 0, 0] : f32 from vector<1x1x1xf32>
    %380 = vector.broadcast %379 : f32 to vector<1x1xf32>
    %cst_64 = arith.constant 9.99999974E-6 : f32
    %381 = vector.broadcast %cst_64 : f32 to vector<1x1xf32>
    %382 = arith.addf %380, %381 : vector<1x1xf32>
    %383 = tpu.reciprocal %382 {approx = true} : vector<1x1xf32> -> vector<1x1xf32>
    %384 = arith.mulf %375, %383 : vector<1x1xf32>
    %385 = arith.addf %305, %384 : vector<1x1xf32>
    %386 = vector.broadcast %367 : vector<8x1xf32> to vector<8x128xf32>
    %387 = vector.broadcast %7 : vector<1x128xf32> to vector<8x128xf32>
    %388 = arith.mulf %386, %387 : vector<8x128xf32>
    %389 = vector.broadcast %344 : vector<8x1xf32> to vector<8x128xf32>
    %390 = vector.broadcast %8 : vector<1x128xf32> to vector<8x128xf32>
    %391 = arith.mulf %389, %390 : vector<8x128xf32>
    %392 = arith.addf %388, %391 : vector<8x128xf32>
    %cst_65 = arith.constant dense<0.000000e+00> : vector<8x128xf32>
    %393 = tpu.matmul %356, %5, %cst_65 {dimension_numbers = #tpu.dot_dimension_numbers<[1], [0], [0], [1], [0, 0, 1, 1], [], []>} : vector<8x32xf32>, vector<32x128xf32>, vector<8x128xf32> -> vector<8x128xf32>
    %394 = arith.addf %392, %393 : vector<8x128xf32>
    %395 = vector.broadcast %9 : vector<1x128xf32> to vector<8x128xf32>
    %396 = arith.addf %394, %395 : vector<8x128xf32>
    %397 = vector.extract_strided_slice %396 {offsets = [0, 0], sizes = [8, 32], strides = [1, 1]} : vector<8x128xf32> to vector<8x32xf32>
    %398 = arith.negf %397 : vector<8x32xf32>
    %399 = math.exp %398 : vector<8x32xf32>
    %cst_66 = arith.constant 1.000000e+00 : f32
    %400 = vector.broadcast %cst_66 : f32 to vector<8x32xf32>
    %401 = arith.addf %400, %399 : vector<8x32xf32>
    %402 = arith.divf %400, %401 : vector<8x32xf32>
    %403 = vector.extract_strided_slice %396 {offsets = [0, 32], sizes = [8, 32], strides = [1, 1]} : vector<8x128xf32> to vector<8x32xf32>
    %404 = arith.negf %403 : vector<8x32xf32>
    %405 = math.exp %404 : vector<8x32xf32>
    %cst_67 = arith.constant 1.000000e+00 : f32
    %406 = vector.broadcast %cst_67 : f32 to vector<8x32xf32>
    %407 = arith.addf %406, %405 : vector<8x32xf32>
    %408 = arith.divf %406, %407 : vector<8x32xf32>
    %409 = vector.extract_strided_slice %396 {offsets = [0, 64], sizes = [8, 32], strides = [1, 1]} : vector<8x128xf32> to vector<8x32xf32>
    %410 = math.tanh %409 : vector<8x32xf32>
    %411 = vector.extract_strided_slice %396 {offsets = [0, 96], sizes = [8, 32], strides = [1, 1]} : vector<8x128xf32> to vector<8x32xf32>
    %412 = arith.negf %411 : vector<8x32xf32>
    %413 = math.exp %412 : vector<8x32xf32>
    %cst_68 = arith.constant 1.000000e+00 : f32
    %414 = vector.broadcast %cst_68 : f32 to vector<8x32xf32>
    %415 = arith.addf %414, %413 : vector<8x32xf32>
    %416 = arith.divf %414, %415 : vector<8x32xf32>
    %417 = arith.mulf %408, %339 : vector<8x32xf32>
    %418 = arith.mulf %402, %410 : vector<8x32xf32>
    %419 = arith.addf %417, %418 : vector<8x32xf32>
    %420 = math.tanh %419 : vector<8x32xf32>
    %421 = arith.mulf %416, %420 : vector<8x32xf32>
    %c0_69 = arith.constant 0 : index
    %c4 = arith.constant 4 : index
    %422 = vector.load %arg4[%c0_69, %c4] : memref<8x10xf32, #tpu.memory_space<vmem>>, vector<8x1xf32>
    tpu.vector_store %arg4[%c0_69, %c4], %367 {strides = array<i32>} : memref<8x10xf32, #tpu.memory_space<vmem>>, vector<8x1xf32>,
    %423 = vector.extract_strided_slice %1 {offsets = [0, 5], sizes = [8, 1], strides = [1, 1]} : vector<8x8xf32> to vector<8x1xf32>
    %424 = vector.extract_strided_slice %2 {offsets = [0, 5], sizes = [8, 1], strides = [1, 1]} : vector<8x8xf32> to vector<8x1xf32>
    %425 = vector.extract_strided_slice %3 {offsets = [0, 5], sizes = [8, 1], strides = [1, 1]} : vector<8x8xf32> to vector<8x1xf32>
    %426 = vector.broadcast %425 : vector<8x1xf32> to vector<8x32xf32>
    %427 = vector.broadcast %11 : vector<1x32xf32> to vector<8x32xf32>
    %428 = arith.mulf %426, %427 : vector<8x32xf32>
    %429 = vector.broadcast %12 : vector<1x32xf32> to vector<8x32xf32>
    %430 = arith.addf %428, %429 : vector<8x32xf32>
    %cst_70 = arith.constant 0.000000e+00 : f32
    %431 = vector.broadcast %cst_70 : f32 to vector<8x32xf32>
    %432 = arith.maximumf %430, %431 : vector<8x32xf32>
    %cst_71 = arith.constant 0.000000e+00 : f32
    %433 = vector.broadcast %cst_71 : f32 to vector<8x32xf32>
    %434 = arith.subf %433, %432 : vector<8x32xf32>
    %435 = math.exp %434 : vector<8x32xf32>
    %436 = arith.mulf %421, %435 : vector<8x32xf32>
    %437 = vector.broadcast %13 : vector<1x32xf32> to vector<8x32xf32>
    %438 = arith.mulf %436, %437 : vector<8x32xf32>
    %cst_72 = arith.constant dense<0.000000e+00> : vector<8xf32>
    %439 = vector.multi_reduction <add>, %438, %cst_72 [1] : vector<8x32xf32> to vector<8xf32>
    %440 = vector.shape_cast %439 : vector<8xf32> to vector<8x1xf32>
    %441 = vector.broadcast %16 : vector<1x1xf32> to vector<8x1xf32>
    %442 = arith.addf %440, %441 : vector<8x1xf32>
    %443 = arith.mulf %424, %423 : vector<8x1xf32>
    %cst_73 = arith.constant 1.000000e+00 : f32
    %444 = vector.broadcast %cst_73 : f32 to vector<8x1xf32>
    %445 = arith.subf %444, %424 : vector<8x1xf32>
    %446 = arith.mulf %445, %442 : vector<8x1xf32>
    %447 = arith.addf %443, %446 : vector<8x1xf32>
    %448 = arith.subf %423, %442 : vector<8x1xf32>
    %449 = math.absf %448 : vector<8x1xf32>
    %450 = arith.mulf %449, %424 : vector<8x1xf32>
    %451 = vector.shape_cast %450 : vector<8x1xf32> to vector<1x8x1xf32>
    %cst_74 = arith.constant dense<0.000000e+00> : vector<1xf32>
    %452 = vector.multi_reduction <add>, %451, %cst_74 [1, 2] : vector<1x8x1xf32> to vector<1xf32>
    %453 = vector.shape_cast %452 : vector<1xf32> to vector<1x1x1xf32>
    %454 = vector.extract %453[0, 0, 0] : f32 from vector<1x1x1xf32>
    %455 = vector.broadcast %454 : f32 to vector<1x1xf32>
    %456 = vector.shape_cast %424 : vector<8x1xf32> to vector<1x8x1xf32>
    %cst_75 = arith.constant dense<0.000000e+00> : vector<1xf32>
    %457 = vector.multi_reduction <add>, %456, %cst_75 [1, 2] : vector<1x8x1xf32> to vector<1xf32>
    %458 = vector.shape_cast %457 : vector<1xf32> to vector<1x1x1xf32>
    %459 = vector.extract %458[0, 0, 0] : f32 from vector<1x1x1xf32>
    %460 = vector.broadcast %459 : f32 to vector<1x1xf32>
    %cst_76 = arith.constant 9.99999974E-6 : f32
    %461 = vector.broadcast %cst_76 : f32 to vector<1x1xf32>
    %462 = arith.addf %460, %461 : vector<1x1xf32>
    %463 = tpu.reciprocal %462 {approx = true} : vector<1x1xf32> -> vector<1x1xf32>
    %464 = arith.mulf %455, %463 : vector<1x1xf32>
    %465 = arith.addf %385, %464 : vector<1x1xf32>
    %466 = vector.broadcast %447 : vector<8x1xf32> to vector<8x128xf32>
    %467 = vector.broadcast %7 : vector<1x128xf32> to vector<8x128xf32>
    %468 = arith.mulf %466, %467 : vector<8x128xf32>
    %469 = vector.broadcast %424 : vector<8x1xf32> to vector<8x128xf32>
    %470 = vector.broadcast %8 : vector<1x128xf32> to vector<8x128xf32>
    %471 = arith.mulf %469, %470 : vector<8x128xf32>
    %472 = arith.addf %468, %471 : vector<8x128xf32>
    %cst_77 = arith.constant dense<0.000000e+00> : vector<8x128xf32>
    %473 = tpu.matmul %436, %5, %cst_77 {dimension_numbers = #tpu.dot_dimension_numbers<[1], [0], [0], [1], [0, 0, 1, 1], [], []>} : vector<8x32xf32>, vector<32x128xf32>, vector<8x128xf32> -> vector<8x128xf32>
    %474 = arith.addf %472, %473 : vector<8x128xf32>
    %475 = vector.broadcast %9 : vector<1x128xf32> to vector<8x128xf32>
    %476 = arith.addf %474, %475 : vector<8x128xf32>
    %477 = vector.extract_strided_slice %476 {offsets = [0, 0], sizes = [8, 32], strides = [1, 1]} : vector<8x128xf32> to vector<8x32xf32>
    %478 = arith.negf %477 : vector<8x32xf32>
    %479 = math.exp %478 : vector<8x32xf32>
    %cst_78 = arith.constant 1.000000e+00 : f32
    %480 = vector.broadcast %cst_78 : f32 to vector<8x32xf32>
    %481 = arith.addf %480, %479 : vector<8x32xf32>
    %482 = arith.divf %480, %481 : vector<8x32xf32>
    %483 = vector.extract_strided_slice %476 {offsets = [0, 32], sizes = [8, 32], strides = [1, 1]} : vector<8x128xf32> to vector<8x32xf32>
    %484 = arith.negf %483 : vector<8x32xf32>
    %485 = math.exp %484 : vector<8x32xf32>
    %cst_79 = arith.constant 1.000000e+00 : f32
    %486 = vector.broadcast %cst_79 : f32 to vector<8x32xf32>
    %487 = arith.addf %486, %485 : vector<8x32xf32>
    %488 = arith.divf %486, %487 : vector<8x32xf32>
    %489 = vector.extract_strided_slice %476 {offsets = [0, 64], sizes = [8, 32], strides = [1, 1]} : vector<8x128xf32> to vector<8x32xf32>
    %490 = math.tanh %489 : vector<8x32xf32>
    %491 = vector.extract_strided_slice %476 {offsets = [0, 96], sizes = [8, 32], strides = [1, 1]} : vector<8x128xf32> to vector<8x32xf32>
    %492 = arith.negf %491 : vector<8x32xf32>
    %493 = math.exp %492 : vector<8x32xf32>
    %cst_80 = arith.constant 1.000000e+00 : f32
    %494 = vector.broadcast %cst_80 : f32 to vector<8x32xf32>
    %495 = arith.addf %494, %493 : vector<8x32xf32>
    %496 = arith.divf %494, %495 : vector<8x32xf32>
    %497 = arith.mulf %488, %419 : vector<8x32xf32>
    %498 = arith.mulf %482, %490 : vector<8x32xf32>
    %499 = arith.addf %497, %498 : vector<8x32xf32>
    %500 = math.tanh %499 : vector<8x32xf32>
    %501 = arith.mulf %496, %500 : vector<8x32xf32>
    %c0_81 = arith.constant 0 : index
    %c5 = arith.constant 5 : index
    %502 = vector.load %arg4[%c0_81, %c5] : memref<8x10xf32, #tpu.memory_space<vmem>>, vector<8x1xf32>
    tpu.vector_store %arg4[%c0_81, %c5], %447 {strides = array<i32>} : memref<8x10xf32, #tpu.memory_space<vmem>>, vector<8x1xf32>,
    %503 = vector.extract_strided_slice %1 {offsets = [0, 6], sizes = [8, 1], strides = [1, 1]} : vector<8x8xf32> to vector<8x1xf32>
    %504 = vector.extract_strided_slice %2 {offsets = [0, 6], sizes = [8, 1], strides = [1, 1]} : vector<8x8xf32> to vector<8x1xf32>
    %505 = vector.extract_strided_slice %3 {offsets = [0, 6], sizes = [8, 1], strides = [1, 1]} : vector<8x8xf32> to vector<8x1xf32>
    %506 = vector.broadcast %505 : vector<8x1xf32> to vector<8x32xf32>
    %507 = vector.broadcast %11 : vector<1x32xf32> to vector<8x32xf32>
    %508 = arith.mulf %506, %507 : vector<8x32xf32>
    %509 = vector.broadcast %12 : vector<1x32xf32> to vector<8x32xf32>
    %510 = arith.addf %508, %509 : vector<8x32xf32>
    %cst_82 = arith.constant 0.000000e+00 : f32
    %511 = vector.broadcast %cst_82 : f32 to vector<8x32xf32>
    %512 = arith.maximumf %510, %511 : vector<8x32xf32>
    %cst_83 = arith.constant 0.000000e+00 : f32
    %513 = vector.broadcast %cst_83 : f32 to vector<8x32xf32>
    %514 = arith.subf %513, %512 : vector<8x32xf32>
    %515 = math.exp %514 : vector<8x32xf32>
    %516 = arith.mulf %501, %515 : vector<8x32xf32>
    %517 = vector.broadcast %13 : vector<1x32xf32> to vector<8x32xf32>
    %518 = arith.mulf %516, %517 : vector<8x32xf32>
    %cst_84 = arith.constant dense<0.000000e+00> : vector<8xf32>
    %519 = vector.multi_reduction <add>, %518, %cst_84 [1] : vector<8x32xf32> to vector<8xf32>
    %520 = vector.shape_cast %519 : vector<8xf32> to vector<8x1xf32>
    %521 = vector.broadcast %16 : vector<1x1xf32> to vector<8x1xf32>
    %522 = arith.addf %520, %521 : vector<8x1xf32>
    %523 = arith.mulf %504, %503 : vector<8x1xf32>
    %cst_85 = arith.constant 1.000000e+00 : f32
    %524 = vector.broadcast %cst_85 : f32 to vector<8x1xf32>
    %525 = arith.subf %524, %504 : vector<8x1xf32>
    %526 = arith.mulf %525, %522 : vector<8x1xf32>
    %527 = arith.addf %523, %526 : vector<8x1xf32>
    %528 = arith.subf %503, %522 : vector<8x1xf32>
    %529 = math.absf %528 : vector<8x1xf32>
    %530 = arith.mulf %529, %504 : vector<8x1xf32>
    %531 = vector.shape_cast %530 : vector<8x1xf32> to vector<1x8x1xf32>
    %cst_86 = arith.constant dense<0.000000e+00> : vector<1xf32>
    %532 = vector.multi_reduction <add>, %531, %cst_86 [1, 2] : vector<1x8x1xf32> to vector<1xf32>
    %533 = vector.shape_cast %532 : vector<1xf32> to vector<1x1x1xf32>
    %534 = vector.extract %533[0, 0, 0] : f32 from vector<1x1x1xf32>
    %535 = vector.broadcast %534 : f32 to vector<1x1xf32>
    %536 = vector.shape_cast %504 : vector<8x1xf32> to vector<1x8x1xf32>
    %cst_87 = arith.constant dense<0.000000e+00> : vector<1xf32>
    %537 = vector.multi_reduction <add>, %536, %cst_87 [1, 2] : vector<1x8x1xf32> to vector<1xf32>
    %538 = vector.shape_cast %537 : vector<1xf32> to vector<1x1x1xf32>
    %539 = vector.extract %538[0, 0, 0] : f32 from vector<1x1x1xf32>
    %540 = vector.broadcast %539 : f32 to vector<1x1xf32>
    %cst_88 = arith.constant 9.99999974E-6 : f32
    %541 = vector.broadcast %cst_88 : f32 to vector<1x1xf32>
    %542 = arith.addf %540, %541 : vector<1x1xf32>
    %543 = tpu.reciprocal %542 {approx = true} : vector<1x1xf32> -> vector<1x1xf32>
    %544 = arith.mulf %535, %543 : vector<1x1xf32>
    %545 = arith.addf %465, %544 : vector<1x1xf32>
    %546 = vector.broadcast %527 : vector<8x1xf32> to vector<8x128xf32>
    %547 = vector.broadcast %7 : vector<1x128xf32> to vector<8x128xf32>
    %548 = arith.mulf %546, %547 : vector<8x128xf32>
    %549 = vector.broadcast %504 : vector<8x1xf32> to vector<8x128xf32>
    %550 = vector.broadcast %8 : vector<1x128xf32> to vector<8x128xf32>
    %551 = arith.mulf %549, %550 : vector<8x128xf32>
    %552 = arith.addf %548, %551 : vector<8x128xf32>
    %cst_89 = arith.constant dense<0.000000e+00> : vector<8x128xf32>
    %553 = tpu.matmul %516, %5, %cst_89 {dimension_numbers = #tpu.dot_dimension_numbers<[1], [0], [0], [1], [0, 0, 1, 1], [], []>} : vector<8x32xf32>, vector<32x128xf32>, vector<8x128xf32> -> vector<8x128xf32>
    %554 = arith.addf %552, %553 : vector<8x128xf32>
    %555 = vector.broadcast %9 : vector<1x128xf32> to vector<8x128xf32>
    %556 = arith.addf %554, %555 : vector<8x128xf32>
    %557 = vector.extract_strided_slice %556 {offsets = [0, 0], sizes = [8, 32], strides = [1, 1]} : vector<8x128xf32> to vector<8x32xf32>
    %558 = arith.negf %557 : vector<8x32xf32>
    %559 = math.exp %558 : vector<8x32xf32>
    %cst_90 = arith.constant 1.000000e+00 : f32
    %560 = vector.broadcast %cst_90 : f32 to vector<8x32xf32>
    %561 = arith.addf %560, %559 : vector<8x32xf32>
    %562 = arith.divf %560, %561 : vector<8x32xf32>
    %563 = vector.extract_strided_slice %556 {offsets = [0, 32], sizes = [8, 32], strides = [1, 1]} : vector<8x128xf32> to vector<8x32xf32>
    %564 = arith.negf %563 : vector<8x32xf32>
    %565 = math.exp %564 : vector<8x32xf32>
    %cst_91 = arith.constant 1.000000e+00 : f32
    %566 = vector.broadcast %cst_91 : f32 to vector<8x32xf32>
    %567 = arith.addf %566, %565 : vector<8x32xf32>
    %568 = arith.divf %566, %567 : vector<8x32xf32>
    %569 = vector.extract_strided_slice %556 {offsets = [0, 64], sizes = [8, 32], strides = [1, 1]} : vector<8x128xf32> to vector<8x32xf32>
    %570 = math.tanh %569 : vector<8x32xf32>
    %571 = vector.extract_strided_slice %556 {offsets = [0, 96], sizes = [8, 32], strides = [1, 1]} : vector<8x128xf32> to vector<8x32xf32>
    %572 = arith.negf %571 : vector<8x32xf32>
    %573 = math.exp %572 : vector<8x32xf32>
    %cst_92 = arith.constant 1.000000e+00 : f32
    %574 = vector.broadcast %cst_92 : f32 to vector<8x32xf32>
    %575 = arith.addf %574, %573 : vector<8x32xf32>
    %576 = arith.divf %574, %575 : vector<8x32xf32>
    %577 = arith.mulf %568, %499 : vector<8x32xf32>
    %578 = arith.mulf %562, %570 : vector<8x32xf32>
    %579 = arith.addf %577, %578 : vector<8x32xf32>
    %580 = math.tanh %579 : vector<8x32xf32>
    %581 = arith.mulf %576, %580 : vector<8x32xf32>
    %c0_93 = arith.constant 0 : index
    %c6 = arith.constant 6 : index
    %582 = vector.load %arg4[%c0_93, %c6] : memref<8x10xf32, #tpu.memory_space<vmem>>, vector<8x1xf32>
    tpu.vector_store %arg4[%c0_93, %c6], %527 {strides = array<i32>} : memref<8x10xf32, #tpu.memory_space<vmem>>, vector<8x1xf32>,
    %583 = vector.extract_strided_slice %1 {offsets = [0, 7], sizes = [8, 1], strides = [1, 1]} : vector<8x8xf32> to vector<8x1xf32>
    %584 = vector.extract_strided_slice %2 {offsets = [0, 7], sizes = [8, 1], strides = [1, 1]} : vector<8x8xf32> to vector<8x1xf32>
    %585 = vector.extract_strided_slice %3 {offsets = [0, 7], sizes = [8, 1], strides = [1, 1]} : vector<8x8xf32> to vector<8x1xf32>
    %586 = vector.broadcast %585 : vector<8x1xf32> to vector<8x32xf32>
    %587 = vector.broadcast %11 : vector<1x32xf32> to vector<8x32xf32>
    %588 = arith.mulf %586, %587 : vector<8x32xf32>
    %589 = vector.broadcast %12 : vector<1x32xf32> to vector<8x32xf32>
    %590 = arith.addf %588, %589 : vector<8x32xf32>
    %cst_94 = arith.constant 0.000000e+00 : f32
    %591 = vector.broadcast %cst_94 : f32 to vector<8x32xf32>
    %592 = arith.maximumf %590, %591 : vector<8x32xf32>
    %cst_95 = arith.constant 0.000000e+00 : f32
    %593 = vector.broadcast %cst_95 : f32 to vector<8x32xf32>
    %594 = arith.subf %593, %592 : vector<8x32xf32>
    %595 = math.exp %594 : vector<8x32xf32>
    %596 = arith.mulf %581, %595 : vector<8x32xf32>
    %597 = vector.broadcast %13 : vector<1x32xf32> to vector<8x32xf32>
    %598 = arith.mulf %596, %597 : vector<8x32xf32>
    %cst_96 = arith.constant dense<0.000000e+00> : vector<8xf32>
    %599 = vector.multi_reduction <add>, %598, %cst_96 [1] : vector<8x32xf32> to vector<8xf32>
    %600 = vector.shape_cast %599 : vector<8xf32> to vector<8x1xf32>
    %601 = vector.broadcast %16 : vector<1x1xf32> to vector<8x1xf32>
    %602 = arith.addf %600, %601 : vector<8x1xf32>
    %603 = arith.mulf %584, %583 : vector<8x1xf32>
    %cst_97 = arith.constant 1.000000e+00 : f32
    %604 = vector.broadcast %cst_97 : f32 to vector<8x1xf32>
    %605 = arith.subf %604, %584 : vector<8x1xf32>
    %606 = arith.mulf %605, %602 : vector<8x1xf32>
    %607 = arith.addf %603, %606 : vector<8x1xf32>
    %608 = arith.subf %583, %602 : vector<8x1xf32>
    %609 = math.absf %608 : vector<8x1xf32>
    %610 = arith.mulf %609, %584 : vector<8x1xf32>
    %611 = vector.shape_cast %610 : vector<8x1xf32> to vector<1x8x1xf32>
    %cst_98 = arith.constant dense<0.000000e+00> : vector<1xf32>
    %612 = vector.multi_reduction <add>, %611, %cst_98 [1, 2] : vector<1x8x1xf32> to vector<1xf32>
    %613 = vector.shape_cast %612 : vector<1xf32> to vector<1x1x1xf32>
    %614 = vector.extract %613[0, 0, 0] : f32 from vector<1x1x1xf32>
    %615 = vector.broadcast %614 : f32 to vector<1x1xf32>
    %616 = vector.shape_cast %584 : vector<8x1xf32> to vector<1x8x1xf32>
    %cst_99 = arith.constant dense<0.000000e+00> : vector<1xf32>
    %617 = vector.multi_reduction <add>, %616, %cst_99 [1, 2] : vector<1x8x1xf32> to vector<1xf32>
    %618 = vector.shape_cast %617 : vector<1xf32> to vector<1x1x1xf32>
    %619 = vector.extract %618[0, 0, 0] : f32 from vector<1x1x1xf32>
    %620 = vector.broadcast %619 : f32 to vector<1x1xf32>
    %cst_100 = arith.constant 9.99999974E-6 : f32
    %621 = vector.broadcast %cst_100 : f32 to vector<1x1xf32>
    %622 = arith.addf %620, %621 : vector<1x1xf32>
    %623 = tpu.reciprocal %622 {approx = true} : vector<1x1xf32> -> vector<1x1xf32>
    %624 = arith.mulf %615, %623 : vector<1x1xf32>
    %625 = arith.addf %545, %624 : vector<1x1xf32>
    %626 = vector.broadcast %607 : vector<8x1xf32> to vector<8x128xf32>
    %627 = vector.broadcast %7 : vector<1x128xf32> to vector<8x128xf32>
    %628 = arith.mulf %626, %627 : vector<8x128xf32>
    %629 = vector.broadcast %584 : vector<8x1xf32> to vector<8x128xf32>
    %630 = vector.broadcast %8 : vector<1x128xf32> to vector<8x128xf32>
    %631 = arith.mulf %629, %630 : vector<8x128xf32>
    %632 = arith.addf %628, %631 : vector<8x128xf32>
    %cst_101 = arith.constant dense<0.000000e+00> : vector<8x128xf32>
    %633 = tpu.matmul %596, %5, %cst_101 {dimension_numbers = #tpu.dot_dimension_numbers<[1], [0], [0], [1], [0, 0, 1, 1], [], []>} : vector<8x32xf32>, vector<32x128xf32>, vector<8x128xf32> -> vector<8x128xf32>
    %634 = arith.addf %632, %633 : vector<8x128xf32>
    %635 = vector.broadcast %9 : vector<1x128xf32> to vector<8x128xf32>
    %636 = arith.addf %634, %635 : vector<8x128xf32>
    %637 = vector.extract_strided_slice %636 {offsets = [0, 0], sizes = [8, 32], strides = [1, 1]} : vector<8x128xf32> to vector<8x32xf32>
    %638 = arith.negf %637 : vector<8x32xf32>
    %639 = math.exp %638 : vector<8x32xf32>
    %cst_102 = arith.constant 1.000000e+00 : f32
    %640 = vector.broadcast %cst_102 : f32 to vector<8x32xf32>
    %641 = arith.addf %640, %639 : vector<8x32xf32>
    %642 = arith.divf %640, %641 : vector<8x32xf32>
    %643 = vector.extract_strided_slice %636 {offsets = [0, 32], sizes = [8, 32], strides = [1, 1]} : vector<8x128xf32> to vector<8x32xf32>
    %644 = arith.negf %643 : vector<8x32xf32>
    %645 = math.exp %644 : vector<8x32xf32>
    %cst_103 = arith.constant 1.000000e+00 : f32
    %646 = vector.broadcast %cst_103 : f32 to vector<8x32xf32>
    %647 = arith.addf %646, %645 : vector<8x32xf32>
    %648 = arith.divf %646, %647 : vector<8x32xf32>
    %649 = vector.extract_strided_slice %636 {offsets = [0, 64], sizes = [8, 32], strides = [1, 1]} : vector<8x128xf32> to vector<8x32xf32>
    %650 = math.tanh %649 : vector<8x32xf32>
    %651 = vector.extract_strided_slice %636 {offsets = [0, 96], sizes = [8, 32], strides = [1, 1]} : vector<8x128xf32> to vector<8x32xf32>
    %652 = arith.negf %651 : vector<8x32xf32>
    %653 = math.exp %652 : vector<8x32xf32>
    %cst_104 = arith.constant 1.000000e+00 : f32
    %654 = vector.broadcast %cst_104 : f32 to vector<8x32xf32>
    %655 = arith.addf %654, %653 : vector<8x32xf32>
    %656 = arith.divf %654, %655 : vector<8x32xf32>
    %657 = arith.mulf %648, %579 : vector<8x32xf32>
    %658 = arith.mulf %642, %650 : vector<8x32xf32>
    %659 = arith.addf %657, %658 : vector<8x32xf32>
    %660 = math.tanh %659 : vector<8x32xf32>
    %661 = arith.mulf %656, %660 : vector<8x32xf32>
    %c0_105 = arith.constant 0 : index
    %c7 = arith.constant 7 : index
    %662 = vector.load %arg4[%c0_105, %c7] : memref<8x10xf32, #tpu.memory_space<vmem>>, vector<8x1xf32>
    tpu.vector_store %arg4[%c0_105, %c7], %607 {strides = array<i32>} : memref<8x10xf32, #tpu.memory_space<vmem>>, vector<8x1xf32>,
    %663 = vector.broadcast %14 : vector<1x32xf32> to vector<8x32xf32>
    %664 = arith.mulf %661, %663 : vector<8x32xf32>
    %cst_106 = arith.constant dense<0.000000e+00> : vector<8xf32>
    %665 = vector.multi_reduction <add>, %664, %cst_106 [1] : vector<8x32xf32> to vector<8xf32>
    %666 = vector.shape_cast %665 : vector<8xf32> to vector<8x1xf32>
    %667 = vector.broadcast %17 : vector<1x1xf32> to vector<8x1xf32>
    %668 = arith.addf %666, %667 : vector<8x1xf32>
    %cst_107 = arith.constant 0.000000e+00 : f32
    %669 = vector.broadcast %cst_107 : f32 to vector<8x1xf32>
    %670 = arith.subf %669, %668 : vector<8x1xf32>
    %cst_108 = arith.constant 0.000000e+00 : f32
    %671 = vector.broadcast %cst_108 : f32 to vector<8x1xf32>
    %672 = arith.maximumf %670, %671 : vector<8x1xf32>
    %673 = arith.mulf %668, %18 : vector<8x1xf32>
    %674 = arith.subf %668, %673 : vector<8x1xf32>
    %675 = arith.addf %674, %672 : vector<8x1xf32>
    %cst_109 = arith.constant 0.000000e+00 : f32
    %676 = vector.broadcast %cst_109 : f32 to vector<8x1xf32>
    %677 = arith.subf %676, %672 : vector<8x1xf32>
    %678 = math.exp %677 : vector<8x1xf32>
    %cst_110 = arith.constant 0.000000e+00 : f32
    %679 = vector.broadcast %cst_110 : f32 to vector<8x1xf32>
    %680 = arith.subf %679, %668 : vector<8x1xf32>
    %681 = arith.subf %680, %672 : vector<8x1xf32>
    %682 = math.exp %681 : vector<8x1xf32>
    %683 = arith.addf %678, %682 : vector<8x1xf32>
    %684 = math.log %683 : vector<8x1xf32>
    %685 = arith.addf %675, %684 : vector<8x1xf32>
    %686 = arith.mulf %685, %19 : vector<8x1xf32>
    %687 = vector.shape_cast %686 : vector<8x1xf32> to vector<1x8x1xf32>
    %cst_111 = arith.constant dense<0.000000e+00> : vector<1xf32>
    %688 = vector.multi_reduction <add>, %687, %cst_111 [1, 2] : vector<1x8x1xf32> to vector<1xf32>
    %689 = vector.shape_cast %688 : vector<1xf32> to vector<1x1x1xf32>
    %690 = vector.extract %689[0, 0, 0] : f32 from vector<1x1x1xf32>
    %691 = vector.broadcast %690 : f32 to vector<1x1xf32>
    %692 = vector.shape_cast %19 : vector<8x1xf32> to vector<1x8x1xf32>
    %cst_112 = arith.constant dense<0.000000e+00> : vector<1xf32>
    %693 = vector.multi_reduction <add>, %692, %cst_112 [1, 2] : vector<1x8x1xf32> to vector<1xf32>
    %694 = vector.shape_cast %693 : vector<1xf32> to vector<1x1x1xf32>
    %695 = vector.extract %694[0, 0, 0] : f32 from vector<1x1x1xf32>
    %696 = vector.broadcast %695 : f32 to vector<1x1xf32>
    %cst_113 = arith.constant 9.99999974E-6 : f32
    %697 = vector.broadcast %cst_113 : f32 to vector<1x1xf32>
    %698 = arith.addf %696, %697 : vector<1x1xf32>
    %699 = tpu.reciprocal %698 {approx = true} : vector<1x1xf32> -> vector<1x1xf32>
    %700 = arith.mulf %691, %699 : vector<1x1xf32>
    %cst_114 = arith.constant 3.000000e-01 : f32
    %701 = vector.broadcast %cst_114 : f32 to vector<1x1xf32>
    %702 = arith.mulf %625, %701 : vector<1x1xf32>
    %cst_115 = arith.constant 1.000000e+00 : f32
    %703 = vector.broadcast %cst_115 : f32 to vector<1x1xf32>
    %704 = arith.mulf %700, %703 : vector<1x1xf32>
    %705 = arith.addf %702, %704 : vector<1x1xf32>
    %706 = arith.negf %668 : vector<8x1xf32>
    %707 = math.exp %706 : vector<8x1xf32>
    %cst_116 = arith.constant 1.000000e+00 : f32
    %708 = vector.broadcast %cst_116 : f32 to vector<8x1xf32>
    %709 = arith.addf %708, %707 : vector<8x1xf32>
    %710 = arith.divf %708, %709 : vector<8x1xf32>
    %c0_117 = arith.constant 0 : index
    %c8 = arith.constant 8 : index
    %711 = vector.load %arg4[%c0_117, %c8] : memref<8x10xf32, #tpu.memory_space<vmem>>, vector<8x1xf32>
    tpu.vector_store %arg4[%c0_117, %c8], %710 {strides = array<i32>} : memref<8x10xf32, #tpu.memory_space<vmem>>, vector<8x1xf32>,
    %712 = vector.shape_cast %705 : vector<1x1xf32> to vector<1x1xf32>
    %713 = vector.broadcast %712 : vector<1x1xf32> to vector<8x1xf32>
    %c0_118 = arith.constant 0 : index
    %c9 = arith.constant 9 : index
    %714 = vector.load %arg4[%c0_118, %c9] : memref<8x10xf32, #tpu.memory_space<vmem>>, vector<8x1xf32>
    tpu.vector_store %arg4[%c0_118, %c9], %713 {strides = array<i32>} : memref<8x10xf32, #tpu.memory_space<vmem>>, vector<8x1xf32>,
    return
  }
  func.func @transform_0(%arg0: i32) -> (i32, i32) {
    %c0_i32 = arith.constant 0 : i32
    %c0_i32_0 = arith.constant 0 : i32
    %c0_i32_1 = arith.constant 0 : i32
    return %c0_i32, %c0_i32_0 : i32, i32
  }
  func.func @transform_1(%arg0: i32) -> (i32, i32) {
    %c0_i32 = arith.constant 0 : i32
    %c0_i32_0 = arith.constant 0 : i32
    %c0_i32_1 = arith.constant 0 : i32
    return %c0_i32, %c0_i32_0 : i32, i32
  }
  func.func @transform_2(%arg0: i32) -> (i32, i32) {
    %c0_i32 = arith.constant 0 : i32
    %c0_i32_0 = arith.constant 0 : i32
    %c0_i32_1 = arith.constant 0 : i32
    return %c0_i32, %c0_i32_0 : i32, i32
  }
  func.func @transform_3(%arg0: i32) -> (i32, i32) {
    %c0_i32 = arith.constant 0 : i32
    %c0_i32_0 = arith.constant 0 : i32
    %c0_i32_1 = arith.constant 0 : i32
    return %c0_i32, %c0_i32_0 : i32, i32
  }
}

</mosaic_0001>

<llo_original>
// kernel: tpu_custom_call.1
$region0: #{tpu_custom_call.1}
  #allocation0 [shape = 'u32[]', space=smem, size = 0x4, offset = 0x4, fixed_abs, tag = 'smem constant byte address 0x4 - core index']
  #allocation1 [shape = 'u32[144,128]{1,0:T(1,128)}', space=vmem, size = 0x12000, scoped, tag = 'internal scratch']
  %s0 = inlined_call_operand.vmem [shape: f32[24,8], index: 0, kind: input, shape index: {}]
  %s1 = inlined_call_operand.vmem [shape: f32[8,2], index: 1, kind: input, shape index: {}]
  %s2 = inlined_call_operand.vmem [shape: f32[40,128], index: 2, kind: input, shape index: {}]
  %s3 = inlined_call_operand.hbm [shape: f32[8,10], index: 3, kind: output, shape index: {}]
  %s4 = sld [smem:[#allocation0]]
  $region22: #{tpu_custom_call.1} parent=0
    _
  %s6 = ssub.s32 1, %s4
  %s7 = scalar_select 0, %s6, %s4
  $region1: #{tpu_custom_call.1} parent=0
    #allocation2 [shape = 'u8[4096]{0}', space=vmem, size = 0x1000, scoped, tag = 'output window, operand 0, single buffered']
    #allocation3 [shape = 's32[1]{0}', space=sflag, size = 0x4, scoped, tag = 'scoped memory for tpu_custom_call.1']
    %8 = vsyncpa [#allocation3], 0
    // Predicated region
    $region2: #{tpu_custom_call.1} parent=1 // pred_check
      _
    $region3: #{tpu_custom_call.1} parent=1 // pred_check_branch
      %10 = sbr.rel (0) target = $region5
    $region4: #{tpu_custom_call.1} parent=1 // pred_region
      _
    $region5: #{tpu_custom_call.1} parent=1 // pred_fallthru
      _
    // Predicated region
    $region6: #{tpu_custom_call.1} parent=1 // pred_check
      _
    $region7: #{tpu_custom_call.1} parent=1 // pred_check_branch
      %12 = sbr.rel (0) target = $region9
    $region8: #{tpu_custom_call.1} parent=1 // pred_region
      _
    $region9: #{tpu_custom_call.1} parent=1 // pred_fallthru
      _
    // Predicated region
    $region10: #{tpu_custom_call.1} parent=1 // pred_check
      _
    $region11: #{tpu_custom_call.1} parent=1 // pred_check_branch
      %14 = sbr.rel (0) target = $region13
    $region12: #{tpu_custom_call.1} parent=1 // pred_region
      _
    $region13: #{tpu_custom_call.1} parent=1 // pred_fallthru
      _
    %v15 = vld [vmem:[%s0] sm:$0xff]
    %v16 = vld [vmem:[%s0 + $0x8] sm:$0xff]
    %v17 = vld [vmem:[%s0 + $0x10] sm:$0xff]
    %v18 = vld [vmem:[%s2] sm:$0xff]
    %v19 = vld [vmem:[%s2 + $0x8] sm:$0xff]
    %v20 = vld [vmem:[%s2 + $0x10] sm:$0xff]
    %v21 = vld [vmem:[%s2 + $0x18] sm:$0xff]
    %v22 = vld [vmem:[%s2 + $0x20] sm:$0xff]
    %v23 = vld [vmem:[%s1] sm:$0xff]
    %25 = vset.pattern.permute.xlu0 0
    %26 = vperm.xlu0 %25, %v17
    %v27 = vpop.permute.xlu0 %26
    %v29 = vlaneseq
    %v30 = vshrl.u32 %v29, 7
    %v31 = vsub.s32 3, %v30
    %v32 = vrot.slane %v22, %v31
    %v33 = vmul.f32 %v27, %v32
    %35 = vrot.lane.b32.xlu0 %v32, 96
    %v36 = vpop.permute.xlu0 %35
    %v38 = vadd.f32 %v33, %v36
    %v39 = vmax.f32 %v38, 0.0
    %v40 = vsub.f32 0.0, %v39
    %v41 = vmul.f32 %v40, 1.442695
    %v42 = vpow.pop %v41
    %v43 = vmul.f32 %v42, 0.0
    %44 = vrot.lane.b32.xlu0 %v32, 64
    %v45 = vpop.permute.xlu0 %44
    %v47 = vmul.f32 %v43, %v45
    %vm48 = vcmask 261120
    %v49 = vsel %vm48, %v47, 0.0
    %50 = vadd.xlane.f32.xlu0 %v49
    %v51 = vpop.xlane.xlu0 %50
    %v52 = vlaneseq
    %v53 = vshrl.u32 %v52, 7
    %v54 = vsub.s32 4, %v53
    %v55 = vrot.slane %v22, %v54
    %v56 = vadd.f32 %v51, %v55
    %v57 = vmul.f32 %v16, %v15
    %v58 = vsub.f32 1.0, %v16
    %v59 = vmul.f32 %v58, %v56
    %v60 = vadd.f32 %v57, %v59
    %v61 = vsub.f32 %v15, %v56
    %v62 = vand.u32 2147483647, %v61
    %v63 = vmul.f32 %v62, %v16
    %vm64 = vcmask 7168
    %v65 = vsel %vm64, %v63, 0.0
    %66 = vadd.xlane.f32.xlu0 %v65
    %v67 = vpop.xlane.xlu0 %66
    %v68 = vrot.slane %v67, 4
    %v69 = vadd.f32 %v67, %v68
    %v70 = vrot.slane %v69, 2
    %v71 = vadd.f32 %v69, %v70
    %v72 = vrot.slane %v71, 1
    %v73 = vadd.f32 %v71, %v72
    %s74 = vtos %v73
    %v75 = vstv %s74
    %v76 = vsel %vm64, %v16, 0.0
    %77 = vadd.xlane.f32.xlu0 %v76
    %v78 = vpop.xlane.xlu0 %77
    %v79 = vrot.slane %v78, 4
    %v80 = vadd.f32 %v78, %v79
    %v81 = vrot.slane %v80, 2
    %v82 = vadd.f32 %v80, %v81
    %v83 = vrot.slane %v82, 1
    %v84 = vadd.f32 %v82, %v83
    %s85 = vtos %v84
    %v86 = vstv %s85
    %v87 = vadd.f32 %v86, 1e-05
    %v88 = vrcp.pop %v87
    %v89 = vmul.f32 %v75, %v88
    %v90 = vadd.f32 %v89, 0.0
    %92 = vset.pattern.permute.xlu0 0
    %93 = vperm.xlu0 %92, %v60
    %v94 = vpop.permute.xlu0 %93
    %v96 = vlaneseq
    %v97 = vshrl.u32 %v96, 7
    %v98 = vsub.s32 0, %v97
    %v99 = vrot.slane %v22, %v98
    %v100 = vmul.f32 %v94, %v99
    %102 = vset.pattern.permute.xlu0 0
    %103 = vperm.xlu0 %102, %v16
    %v104 = vpop.permute.xlu0 %103
    %v106 = vlaneseq
    %v107 = vshrl.u32 %v106, 7
    %v108 = vsub.s32 1, %v107
    %v109 = vrot.slane %v22, %v108
    %v110 = vmul.f32 %v104, %v109
    %v111 = vadd.f32 %v100, %v110
    %v113 = vsel %vm48, %v43, 0
    %115 = vmatprep.subr.mxu0 0.0
    %116 = vmatpush1.msra.mxu0 %v18
    %117 = vmatprep.subr.mxu0 0.0
    %118 = vmatpush1.msra.mxu0 %v19
    %119 = vmatprep.subr.mxu0 0.0
    %120 = vmatpush1.msra.mxu0 %v20
    %121 = vmatprep.subr.mxu0 0.0
    %122 = vmatpush1.msra.mxu0 %v21
    %123 = vmatprep.subr.mxu0 0.0
    %124 = vmatpush1.msra.mxu0 0.0
    %125 = vmatprep.subr.mxu0 0.0
    %126 = vmatpush1.msra.mxu0 0.0
    %127 = vmatprep.subr.mxu0 0.0
    %128 = vmatpush1.msra.mxu0 0.0
    %129 = vmatprep.subr.mxu0 0.0
    %130 = vmatpush1.msra.mxu0 0.0
    %131 = vmatprep.subr.mxu0 0.0
    %132 = vmatpush1.msra.mxu0 0.0
    %133 = vmatprep.subr.mxu0 0.0
    %134 = vmatpush1.msra.mxu0 0.0
    %135 = vmatprep.subr.mxu0 0.0
    %136 = vmatpush1.msra.mxu0 0.0
    %137 = vmatprep.subr.mxu0 0.0
    %138 = vmatpush1.msra.mxu0 0.0
    %139 = vmatprep.subr.mxu0 0.0
    %140 = vmatpush1.msra.mxu0 0.0
    %141 = vmatprep.subr.mxu0 0.0
    %142 = vmatpush1.msra.mxu0 0.0
    %143 = vmatprep.subr.mxu0 0.0
    %144 = vmatpush1.msra.mxu0 0.0
    %145 = vmatprep.subr.mxu0 0.0
    %146 = vmatpush1.msra.mxu0 0.0
    %147 = vmatprep.subr.mxu0 0.0
    %148 = vmatpush1.msra.mxu0 0.0
    %149 = vmatprep.subr.mxu0 0.0
    %150 = vmatpush1.msra.mxu0 0.0
    %151 = vmatprep.subr.mxu0 0.0
    %152 = vmatpush1.msra.mxu0 0.0
    %153 = vmatprep.subr.mxu0 0.0
    %154 = vmatpush1.msra.mxu0 0.0
    %155 = vmatprep.subr.mxu0 0.0
    %156 = vmatpush1.msra.mxu0 0.0
    %157 = vmatprep.subr.mxu0 0.0
    %158 = vmatpush1.msra.mxu0 0.0
    %159 = vmatprep.subr.mxu0 0.0
    %160 = vmatpush1.msra.mxu0 0.0
    %161 = vmatprep.subr.mxu0 0.0
    %162 = vmatpush1.msra.mxu0 0.0
    %163 = vmatprep.subr.mxu0 0.0
    %164 = vmatpush1.msra.mxu0 0.0
    %165 = vmatprep.subr.mxu0 0.0
    %166 = vmatpush1.msra.mxu0 0.0
    %167 = vmatprep.subr.mxu0 0.0
    %168 = vmatpush1.msra.mxu0 0.0
    %169 = vmatprep.subr.mxu0 0.0
    %170 = vmatpush1.msra.mxu0 0.0
    %171 = vmatprep.subr.mxu0 0.0
    %172 = vmatpush1.msra.mxu0 0.0
    %173 = vmatprep.subr.mxu0 0.0
    %174 = vmatpush1.msra.mxu0 0.0
    %175 = vmatprep.subr.mxu0 0.0
    %176 = vmatpush1.msra.mxu0 0.0
    %177 = vmatprep.subr.mxu0 0.0
    %178 = vmatpush1.msra.mxu0 0.0
    %179 = vmatprep.mubr.f32.mxu0 0.0
    %180 = vmatmul.mubr.f32.gmra.mrb[0].mxu0 %v113
    %v181 = vpop.f32.mrb[0].mxu0
    %v182 = vadd.f32 0.0, %v181
    %v183 = vpop.f32.mrb[0].mxu0
    %184 = vdwg.mxu0
    %v185 = vadd.f32 %v111, %v182
    %v186 = vlaneseq
    %v187 = vshrl.u32 %v186, 7
    %v188 = vsub.s32 2, %v187
    %v189 = vrot.slane %v22, %v188
    %v190 = vadd.f32 %v185, %v189
    %v191 = vxor.u32 %v190, 2147483648
    %v192 = vmul.f32 %v191, 1.442695
    %v193 = vpow.pop %v192
    %v194 = vadd.f32 %v193, 1.0
    %v195 = vrcp.pop %v194
    %v196 = vmul.f32 1.0, %v195
    %v197 = vtanh.pop %v190
    %v198 = vmul.f32 %v196, 0.0
    %200 = vrot.lane.b32.xlu0 %v197, 64
    %v201 = vpop.permute.xlu0 %200
    %v203 = vmul.f32 %v196, %v201
    %205 = vrot.lane.b32.xlu0 %v203, 32
    %v206 = vpop.permute.xlu0 %205
    %v208 = vadd.f32 %v198, %v206
    %v209 = vtanh.pop %v208
    %211 = vrot.lane.b32.xlu0 %v209, 64
    %v212 = vpop.permute.xlu0 %211
    %v214 = vmul.f32 %v196, %v212
    %215 = vst.msk [vmem:[#allocation2] sm:$0xff] %vm64, %v60
    %216 = vset.pattern.permute.xlu0 1
    %217 = vperm.xlu0 %216, %v17
    %v218 = vpop.permute.xlu0 %217
    %v220 = vmul.f32 %v218, %v32
    %v221 = vadd.f32 %v220, %v36
    %v222 = vmax.f32 %v221, 0.0
    %v223 = vsub.f32 0.0, %v222
    %v224 = vmul.f32 %v223, 1.442695
    %v225 = vpow.pop %v224
    %227 = vrot.lane.b32.xlu0 %v225, 96
    %v228 = vpop.permute.xlu0 %227
    %v230 = vmul.f32 %v214, %v228
    %231 = vrot.lane.b32.xlu0 %v32, 32
    %v232 = vpop.permute.xlu0 %231
    %v234 = vmul.f32 %v230, %v232
    %236 = vrot.lane.b32.xlu0 %v234, 32
    %v237 = vpop.permute.xlu0 %236
    %v239 = vsel %vm48, %v237, 0.0
    %240 = vadd.xlane.f32.xlu0 %v239
    %v241 = vpop.xlane.xlu0 %240
    %v242 = vadd.f32 %v241, %v55
    %244 = vrot.lane.b32.xlu0 %v242, 1
    %v245 = vpop.permute.xlu0 %244
    %v247 = vmul.f32 %v58, %v245
    %v248 = vadd.f32 %v57, %v247
    %v249 = vsub.f32 %v15, %v245
    %v250 = vand.u32 2147483647, %v249
    %v251 = vmul.f32 %v250, %v16
    %253 = vrot.lane.b32.xlu0 %v251, 127
    %v254 = vpop.permute.xlu0 %253
    %v256 = vsel %vm64, %v254, 0.0
    %257 = vadd.xlane.f32.xlu0 %v256
    %v258 = vpop.xlane.xlu0 %257
    %v259 = vrot.slane %v258, 4
    %v260 = vadd.f32 %v258, %v259
    %v261 = vrot.slane %v260, 2
    %v262 = vadd.f32 %v260, %v261
    %v263 = vrot.slane %v262, 1
    %v264 = vadd.f32 %v262, %v263
    %s265 = vtos %v264
    %v266 = vstv %s265
    %267 = vrot.lane.b32.xlu0 %v16, 127
    %v268 = vpop.permute.xlu0 %267
    %v270 = vsel %vm64, %v268, 0.0
    %271 = vadd.xlane.f32.xlu0 %v270
    %v272 = vpop.xlane.xlu0 %271
    %v273 = vrot.slane %v272, 4
    %v274 = vadd.f32 %v272, %v273
    %v275 = vrot.slane %v274, 2
    %v276 = vadd.f32 %v274, %v275
    %v277 = vrot.slane %v276, 1
    %v278 = vadd.f32 %v276, %v277
    %s279 = vtos %v278
    %v280 = vstv %s279
    %v281 = vadd.f32 %v280, 1e-05
    %v282 = vrcp.pop %v281
    %v283 = vmul.f32 %v266, %v282
    %v284 = vadd.f32 %v90, %v283
    %286 = vset.pattern.permute.xlu0 1
    %287 = vperm.xlu0 %286, %v248
    %v288 = vpop.permute.xlu0 %287
    %v290 = vmul.f32 %v288, %v99
    %291 = vset.pattern.permute.xlu0 1
    %292 = vperm.xlu0 %291, %v16
    %v293 = vpop.permute.xlu0 %292
    %v295 = vmul.f32 %v293, %v109
    %v296 = vadd.f32 %v290, %v295
    %298 = vrot.lane.b32.xlu0 %v230, 32
    %v299 = vpop.permute.xlu0 %298
    %v300 = vsel %vm48, %v299, 0
    %302 = vmatprep.subr.mxu0 0.0
    %303 = vmatpush1.msra.mxu0 %v18
    %304 = vmatprep.subr.mxu0 0.0
    %305 = vmatpush1.msra.mxu0 %v19
    %306 = vmatprep.subr.mxu0 0.0
    %307 = vmatpush1.msra.mxu0 %v20
    %308 = vmatprep.subr.mxu0 0.0
    %309 = vmatpush1.msra.mxu0 %v21
    %310 = vmatprep.subr.mxu0 0.0
    %311 = vmatpush1.msra.mxu0 0.0
    %312 = vmatprep.subr.mxu0 0.0
    %313 = vmatpush1.msra.mxu0 0.0
    %314 = vmatprep.subr.mxu0 0.0
    %315 = vmatpush1.msra.mxu0 0.0
    %316 = vmatprep.subr.mxu0 0.0
    %317 = vmatpush1.msra.mxu0 0.0
    %318 = vmatprep.subr.mxu0 0.0
    %319 = vmatpush1.msra.mxu0 0.0
    %320 = vmatprep.subr.mxu0 0.0
    %321 = vmatpush1.msra.mxu0 0.0
    %322 = vmatprep.subr.mxu0 0.0
    %323 = vmatpush1.msra.mxu0 0.0
    %324 = vmatprep.subr.mxu0 0.0
    %325 = vmatpush1.msra.mxu0 0.0
    %326 = vmatprep.subr.mxu0 0.0
    %327 = vmatpush1.msra.mxu0 0.0
    %328 = vmatprep.subr.mxu0 0.0
    %329 = vmatpush1.msra.mxu0 0.0
    %330 = vmatprep.subr.mxu0 0.0
    %331 = vmatpush1.msra.mxu0 0.0
    %332 = vmatprep.subr.mxu0 0.0
    %333 = vmatpush1.msra.mxu0 0.0
    %334 = vmatprep.subr.mxu0 0.0
    %335 = vmatpush1.msra.mxu0 0.0
    %336 = vmatprep.subr.mxu0 0.0
    %337 = vmatpush1.msra.mxu0 0.0
    %338 = vmatprep.subr.mxu0 0.0
    %339 = vmatpush1.msra.mxu0 0.0
    %340 = vmatprep.subr.mxu0 0.0
    %341 = vmatpush1.msra.mxu0 0.0
    %342 = vmatprep.subr.mxu0 0.0
    %343 = vmatpush1.msra.mxu0 0.0
    %344 = vmatprep.subr.mxu0 0.0
    %345 = vmatpush1.msra.mxu0 0.0
    %346 = vmatprep.subr.mxu0 0.0
    %347 = vmatpush1.msra.mxu0 0.0
    %348 = vmatprep.subr.mxu0 0.0
    %349 = vmatpush1.msra.mxu0 0.0
    %350 = vmatprep.subr.mxu0 0.0
    %351 = vmatpush1.msra.mxu0 0.0
    %352 = vmatprep.subr.mxu0 0.0
    %353 = vmatpush1.msra.mxu0 0.0
    %354 = vmatprep.subr.mxu0 0.0
    %355 = vmatpush1.msra.mxu0 0.0
    %356 = vmatprep.subr.mxu0 0.0
    %357 = vmatpush1.msra.mxu0 0.0
    %358 = vmatprep.subr.mxu0 0.0
    %359 = vmatpush1.msra.mxu0 0.0
    %360 = vmatprep.subr.mxu0 0.0
    %361 = vmatpush1.msra.mxu0 0.0
    %362 = vmatprep.subr.mxu0 0.0
    %363 = vmatpush1.msra.mxu0 0.0
    %364 = vmatprep.subr.mxu0 0.0
    %365 = vmatpush1.msra.mxu0 0.0
    %366 = vmatprep.mubr.f32.mxu0 0.0
    %367 = vmatmul.mubr.f32.gmra.mrb[0].mxu0 %v300
    %v368 = vpop.f32.mrb[0].mxu0
    %v369 = vadd.f32 0.0, %v368
    %v370 = vpop.f32.mrb[0].mxu0
    %371 = vdwg.mxu0
    %v372 = vadd.f32 %v296, %v369
    %v373 = vadd.f32 %v372, %v189
    %v374 = vxor.u32 %v373, 2147483648
    %v375 = vmul.f32 %v374, 1.442695
    %v376 = vpow.pop %v375
    %v377 = vadd.f32 %v376, 1.0
    %v378 = vrcp.pop %v377
    %v379 = vmul.f32 1.0, %v378
    %v380 = vtanh.pop %v373
    %v381 = vmul.f32 %v379, %v208
    %383 = vrot.lane.b32.xlu0 %v380, 64
    %v384 = vpop.permute.xlu0 %383
    %v386 = vmul.f32 %v379, %v384
    %388 = vrot.lane.b32.xlu0 %v386, 32
    %v389 = vpop.permute.xlu0 %388
    %v391 = vadd.f32 %v381, %v389
    %v392 = vtanh.pop %v391
    %394 = vrot.lane.b32.xlu0 %v392, 64
    %v395 = vpop.permute.xlu0 %394
    %v397 = vmul.f32 %v379, %v395
    %vm398 = vcmask 15368
    %399 = vst.msk [vmem:[#allocation2] sm:$0xff] %vm398, %v248
    %400 = vset.pattern.permute.xlu0 2
    %401 = vperm.xlu0 %400, %v17
    %v402 = vpop.permute.xlu0 %401
    %v404 = vmul.f32 %v402, %v32
    %v405 = vadd.f32 %v404, %v36
    %v406 = vmax.f32 %v405, 0.0
    %v407 = vsub.f32 0.0, %v406
    %v408 = vmul.f32 %v407, 1.442695
    %v409 = vpow.pop %v408
    %411 = vrot.lane.b32.xlu0 %v409, 96
    %v412 = vpop.permute.xlu0 %411
    %v414 = vmul.f32 %v397, %v412
    %v415 = vmul.f32 %v414, %v232
    %417 = vrot.lane.b32.xlu0 %v415, 32
    %v418 = vpop.permute.xlu0 %417
    %v420 = vsel %vm48, %v418, 0.0
    %421 = vadd.xlane.f32.xlu0 %v420
    %v422 = vpop.xlane.xlu0 %421
    %v423 = vadd.f32 %v422, %v55
    %425 = vrot.lane.b32.xlu0 %v423, 2
    %v426 = vpop.permute.xlu0 %425
    %v428 = vmul.f32 %v58, %v426
    %v429 = vadd.f32 %v57, %v428
    %v430 = vsub.f32 %v15, %v426
    %v431 = vand.u32 2147483647, %v430
    %v432 = vmul.f32 %v431, %v16
    %434 = vrot.lane.b32.xlu0 %v432, 126
    %v435 = vpop.permute.xlu0 %434
    %v437 = vsel %vm64, %v435, 0.0
    %438 = vadd.xlane.f32.xlu0 %v437
    %v439 = vpop.xlane.xlu0 %438
    %v440 = vrot.slane %v439, 4
    %v441 = vadd.f32 %v439, %v440
    %v442 = vrot.slane %v441, 2
    %v443 = vadd.f32 %v441, %v442
    %v444 = vrot.slane %v443, 1
    %v445 = vadd.f32 %v443, %v444
    %s446 = vtos %v445
    %v447 = vstv %s446
    %448 = vrot.lane.b32.xlu0 %v16, 126
    %v449 = vpop.permute.xlu0 %448
    %v451 = vsel %vm64, %v449, 0.0
    %452 = vadd.xlane.f32.xlu0 %v451
    %v453 = vpop.xlane.xlu0 %452
    %v454 = vrot.slane %v453, 4
    %v455 = vadd.f32 %v453, %v454
    %v456 = vrot.slane %v455, 2
    %v457 = vadd.f32 %v455, %v456
    %v458 = vrot.slane %v457, 1
    %v459 = vadd.f32 %v457, %v458
    %s460 = vtos %v459
    %v461 = vstv %s460
    %v462 = vadd.f32 %v461, 1e-05
    %v463 = vrcp.pop %v462
    %v464 = vmul.f32 %v447, %v463
    %v465 = vadd.f32 %v284, %v464
    %467 = vset.pattern.permute.xlu0 2
    %468 = vperm.xlu0 %467, %v429
    %v469 = vpop.permute.xlu0 %468
    %v471 = vmul.f32 %v469, %v99
    %472 = vset.pattern.permute.xlu0 2
    %473 = vperm.xlu0 %472, %v16
    %v474 = vpop.permute.xlu0 %473
    %v476 = vmul.f32 %v474, %v109
    %v477 = vadd.f32 %v471, %v476
    %479 = vrot.lane.b32.xlu0 %v414, 32
    %v480 = vpop.permute.xlu0 %479
    %v481 = vsel %vm48, %v480, 0
    %483 = vmatprep.subr.mxu0 0.0
    %484 = vmatpush1.msra.mxu0 %v18
    %485 = vmatprep.subr.mxu0 0.0
    %486 = vmatpush1.msra.mxu0 %v19
    %487 = vmatprep.subr.mxu0 0.0
    %488 = vmatpush1.msra.mxu0 %v20
    %489 = vmatprep.subr.mxu0 0.0
    %490 = vmatpush1.msra.mxu0 %v21
    %491 = vmatprep.subr.mxu0 0.0
    %492 = vmatpush1.msra.mxu0 0.0
    %493 = vmatprep.subr.mxu0 0.0
    %494 = vmatpush1.msra.mxu0 0.0
    %495 = vmatprep.subr.mxu0 0.0
    %496 = vmatpush1.msra.mxu0 0.0
    %497 = vmatprep.subr.mxu0 0.0
    %498 = vmatpush1.msra.mxu0 0.0
    %499 = vmatprep.subr.mxu0 0.0
    %500 = vmatpush1.msra.mxu0 0.0
    %501 = vmatprep.subr.mxu0 0.0
    %502 = vmatpush1.msra.mxu0 0.0
    %503 = vmatprep.subr.mxu0 0.0
    %504 = vmatpush1.msra.mxu0 0.0
    %505 = vmatprep.subr.mxu0 0.0
    %506 = vmatpush1.msra.mxu0 0.0
    %507 = vmatprep.subr.mxu0 0.0
    %508 = vmatpush1.msra.mxu0 0.0
    %509 = vmatprep.subr.mxu0 0.0
    %510 = vmatpush1.msra.mxu0 0.0
    %511 = vmatprep.subr.mxu0 0.0
    %512 = vmatpush1.msra.mxu0 0.0
    %513 = vmatprep.subr.mxu0 0.0
    %514 = vmatpush1.msra.mxu0 0.0
    %515 = vmatprep.subr.mxu0 0.0
    %516 = vmatpush1.msra.mxu0 0.0
    %517 = vmatprep.subr.mxu0 0.0
    %518 = vmatpush1.msra.mxu0 0.0
    %519 = vmatprep.subr.mxu0 0.0
    %520 = vmatpush1.msra.mxu0 0.0
    %521 = vmatprep.subr.mxu0 0.0
    %522 = vmatpush1.msra.mxu0 0.0
    %523 = vmatprep.subr.mxu0 0.0
    %524 = vmatpush1.msra.mxu0 0.0
    %525 = vmatprep.subr.mxu0 0.0
    %526 = vmatpush1.msra.mxu0 0.0
    %527 = vmatprep.subr.mxu0 0.0
    %528 = vmatpush1.msra.mxu0 0.0
    %529 = vmatprep.subr.mxu0 0.0
    %530 = vmatpush1.msra.mxu0 0.0
    %531 = vmatprep.subr.mxu0 0.0
    %532 = vmatpush1.msra.mxu0 0.0
    %533 = vmatprep.subr.mxu0 0.0
    %534 = vmatpush1.msra.mxu0 0.0
    %535 = vmatprep.subr.mxu0 0.0
    %536 = vmatpush1.msra.mxu0 0.0
    %537 = vmatprep.subr.mxu0 0.0
    %538 = vmatpush1.msra.mxu0 0.0
    %539 = vmatprep.subr.mxu0 0.0
    %540 = vmatpush1.msra.mxu0 0.0
    %541 = vmatprep.subr.mxu0 0.0
    %542 = vmatpush1.msra.mxu0 0.0
    %543 = vmatprep.subr.mxu0 0.0
    %544 = vmatpush1.msra.mxu0 0.0
    %545 = vmatprep.subr.mxu0 0.0
    %546 = vmatpush1.msra.mxu0 0.0
    %547 = vmatprep.mubr.f32.mxu0 0.0
    %548 = vmatmul.mubr.f32.gmra.mrb[0].mxu0 %v481
    %v549 = vpop.f32.mrb[0].mxu0
    %v550 = vadd.f32 0.0, %v549
    %v551 = vpop.f32.mrb[0].mxu0
    %552 = vdwg.mxu0
    %v553 = vadd.f32 %v477, %v550
    %v554 = vadd.f32 %v553, %v189
    %v555 = vxor.u32 %v554, 2147483648
    %v556 = vmul.f32 %v555, 1.442695
    %v557 = vpow.pop %v556
    %v558 = vadd.f32 %v557, 1.0
    %v559 = vrcp.pop %v558
    %v560 = vmul.f32 1.0, %v559
    %v561 = vtanh.pop %v554
    %v562 = vmul.f32 %v560, %v391
    %564 = vrot.lane.b32.xlu0 %v561, 64
    %v565 = vpop.permute.xlu0 %564
    %v567 = vmul.f32 %v560, %v565
    %569 = vrot.lane.b32.xlu0 %v567, 32
    %v570 = vpop.permute.xlu0 %569
    %v572 = vadd.f32 %v562, %v570
    %v573 = vtanh.pop %v572
    %575 = vrot.lane.b32.xlu0 %v573, 64
    %v576 = vpop.permute.xlu0 %575
    %v578 = vmul.f32 %v560, %v576
    %vm579 = vcmask 23568
    %580 = vst.msk [vmem:[#allocation2] sm:$0xff] %vm579, %v429
    %581 = vset.pattern.permute.xlu0 3
    %582 = vperm.xlu0 %581, %v17
    %v583 = vpop.permute.xlu0 %582
    %v585 = vmul.f32 %v583, %v32
    %v586 = vadd.f32 %v585, %v36
    %v587 = vmax.f32 %v586, 0.0
    %v588 = vsub.f32 0.0, %v587
    %v589 = vmul.f32 %v588, 1.442695
    %v590 = vpow.pop %v589
    %592 = vrot.lane.b32.xlu0 %v590, 96
    %v593 = vpop.permute.xlu0 %592
    %v595 = vmul.f32 %v578, %v593
    %v596 = vmul.f32 %v595, %v232
    %598 = vrot.lane.b32.xlu0 %v596, 32
    %v599 = vpop.permute.xlu0 %598
    %v601 = vsel %vm48, %v599, 0.0
    %602 = vadd.xlane.f32.xlu0 %v601
    %v603 = vpop.xlane.xlu0 %602
    %v604 = vadd.f32 %v603, %v55
    %606 = vrot.lane.b32.xlu0 %v604, 3
    %v607 = vpop.permute.xlu0 %606
    %v609 = vmul.f32 %v58, %v607
    %v610 = vadd.f32 %v57, %v609
    %v611 = vsub.f32 %v15, %v607
    %v612 = vand.u32 2147483647, %v611
    %v613 = vmul.f32 %v612, %v16
    %615 = vrot.lane.b32.xlu0 %v613, 125
    %v616 = vpop.permute.xlu0 %615
    %v618 = vsel %vm64, %v616, 0.0
    %619 = vadd.xlane.f32.xlu0 %v618
    %v620 = vpop.xlane.xlu0 %619
    %v621 = vrot.slane %v620, 4
    %v622 = vadd.f32 %v620, %v621
    %v623 = vrot.slane %v622, 2
    %v624 = vadd.f32 %v622, %v623
    %v625 = vrot.slane %v624, 1
    %v626 = vadd.f32 %v624, %v625
    %s627 = vtos %v626
    %v628 = vstv %s627
    %629 = vrot.lane.b32.xlu0 %v16, 125
    %v630 = vpop.permute.xlu0 %629
    %v632 = vsel %vm64, %v630, 0.0
    %633 = vadd.xlane.f32.xlu0 %v632
    %v634 = vpop.xlane.xlu0 %633
    %v635 = vrot.slane %v634, 4
    %v636 = vadd.f32 %v634, %v635
    %v637 = vrot.slane %v636, 2
    %v638 = vadd.f32 %v636, %v637
    %v639 = vrot.slane %v638, 1
    %v640 = vadd.f32 %v638, %v639
    %s641 = vtos %v640
    %v642 = vstv %s641
    %v643 = vadd.f32 %v642, 1e-05
    %v644 = vrcp.pop %v643
    %v645 = vmul.f32 %v628, %v644
    %v646 = vadd.f32 %v465, %v645
    %648 = vset.pattern.permute.xlu0 3
    %649 = vperm.xlu0 %648, %v610
    %v650 = vpop.permute.xlu0 %649
    %v652 = vmul.f32 %v650, %v99
    %653 = vset.pattern.permute.xlu0 3
    %654 = vperm.xlu0 %653, %v16
    %v655 = vpop.permute.xlu0 %654
    %v657 = vmul.f32 %v655, %v109
    %v658 = vadd.f32 %v652, %v657
    %660 = vrot.lane.b32.xlu0 %v595, 32
    %v661 = vpop.permute.xlu0 %660
    %v662 = vsel %vm48, %v661, 0
    %664 = vmatprep.subr.mxu0 0.0
    %665 = vmatpush1.msra.mxu0 %v18
    %666 = vmatprep.subr.mxu0 0.0
    %667 = vmatpush1.msra.mxu0 %v19
    %668 = vmatprep.subr.mxu0 0.0
    %669 = vmatpush1.msra.mxu0 %v20
    %670 = vmatprep.subr.mxu0 0.0
    %671 = vmatpush1.msra.mxu0 %v21
    %672 = vmatprep.subr.mxu0 0.0
    %673 = vmatpush1.msra.mxu0 0.0
    %674 = vmatprep.subr.mxu0 0.0
    %675 = vmatpush1.msra.mxu0 0.0
    %676 = vmatprep.subr.mxu0 0.0
    %677 = vmatpush1.msra.mxu0 0.0
    %678 = vmatprep.subr.mxu0 0.0
    %679 = vmatpush1.msra.mxu0 0.0
    %680 = vmatprep.subr.mxu0 0.0
    %681 = vmatpush1.msra.mxu0 0.0
    %682 = vmatprep.subr.mxu0 0.0
    %683 = vmatpush1.msra.mxu0 0.0
    %684 = vmatprep.subr.mxu0 0.0
    %685 = vmatpush1.msra.mxu0 0.0
    %686 = vmatprep.subr.mxu0 0.0
    %687 = vmatpush1.msra.mxu0 0.0
    %688 = vmatprep.subr.mxu0 0.0
    %689 = vmatpush1.msra.mxu0 0.0
    %690 = vmatprep.subr.mxu0 0.0
    %691 = vmatpush1.msra.mxu0 0.0
    %692 = vmatprep.subr.mxu0 0.0
    %693 = vmatpush1.msra.mxu0 0.0
    %694 = vmatprep.subr.mxu0 0.0
    %695 = vmatpush1.msra.mxu0 0.0
    %696 = vmatprep.subr.mxu0 0.0
    %697 = vmatpush1.msra.mxu0 0.0
    %698 = vmatprep.subr.mxu0 0.0
    %699 = vmatpush1.msra.mxu0 0.0
    %700 = vmatprep.subr.mxu0 0.0
    %701 = vmatpush1.msra.mxu0 0.0
    %702 = vmatprep.subr.mxu0 0.0
    %703 = vmatpush1.msra.mxu0 0.0
    %704 = vmatprep.subr.mxu0 0.0
    %705 = vmatpush1.msra.mxu0 0.0
    %706 = vmatprep.subr.mxu0 0.0
    %707 = vmatpush1.msra.mxu0 0.0
    %708 = vmatprep.subr.mxu0 0.0
    %709 = vmatpush1.msra.mxu0 0.0
    %710 = vmatprep.subr.mxu0 0.0
    %711 = vmatpush1.msra.mxu0 0.0
    %712 = vmatprep.subr.mxu0 0.0
    %713 = vmatpush1.msra.mxu0 0.0
    %714 = vmatprep.subr.mxu0 0.0
    %715 = vmatpush1.msra.mxu0 0.0
    %716 = vmatprep.subr.mxu0 0.0
    %717 = vmatpush1.msra.mxu0 0.0
    %718 = vmatprep.subr.mxu0 0.0
    %719 = vmatpush1.msra.mxu0 0.0
    %720 = vmatprep.subr.mxu0 0.0
    %721 = vmatpush1.msra.mxu0 0.0
    %722 = vmatprep.subr.mxu0 0.0
    %723 = vmatpush1.msra.mxu0 0.0
    %724 = vmatprep.subr.mxu0 0.0
    %725 = vmatpush1.msra.mxu0 0.0
    %726 = vmatprep.subr.mxu0 0.0
    %727 = vmatpush1.msra.mxu0 0.0
    %728 = vmatprep.mubr.f32.mxu0 0.0
    %729 = vmatmul.mubr.f32.gmra.mrb[0].mxu0 %v662
    %v730 = vpop.f32.mrb[0].mxu0
    %v731 = vadd.f32 0.0, %v730
    %v732 = vpop.f32.mrb[0].mxu0
    %733 = vdwg.mxu0
    %v734 = vadd.f32 %v658, %v731
    %v735 = vadd.f32 %v734, %v189
    %v736 = vxor.u32 %v735, 2147483648
    %v737 = vmul.f32 %v736, 1.442695
    %v738 = vpow.pop %v737
    %v739 = vadd.f32 %v738, 1.0
    %v740 = vrcp.pop %v739
    %v741 = vmul.f32 1.0, %v740
    %v742 = vtanh.pop %v735
    %v743 = vmul.f32 %v741, %v572
    %745 = vrot.lane.b32.xlu0 %v742, 64
    %v746 = vpop.permute.xlu0 %745
    %v748 = vmul.f32 %v741, %v746
    %750 = vrot.lane.b32.xlu0 %v748, 32
    %v751 = vpop.permute.xlu0 %750
    %v753 = vadd.f32 %v743, %v751
    %v754 = vtanh.pop %v753
    %756 = vrot.lane.b32.xlu0 %v754, 64
    %v757 = vpop.permute.xlu0 %756
    %v759 = vmul.f32 %v741, %v757
    %vm760 = vcmask 31768
    %761 = vst.msk [vmem:[#allocation2] sm:$0xff] %vm760, %v610
    %762 = vset.pattern.permute.xlu0 4
    %763 = vperm.xlu0 %762, %v17
    %v764 = vpop.permute.xlu0 %763
    %v766 = vmul.f32 %v764, %v32
    %v767 = vadd.f32 %v766, %v36
    %v768 = vmax.f32 %v767, 0.0
    %v769 = vsub.f32 0.0, %v768
    %v770 = vmul.f32 %v769, 1.442695
    %v771 = vpow.pop %v770
    %773 = vrot.lane.b32.xlu0 %v771, 96
    %v774 = vpop.permute.xlu0 %773
    %v776 = vmul.f32 %v759, %v774
    %v777 = vmul.f32 %v776, %v232
    %779 = vrot.lane.b32.xlu0 %v777, 32
    %v780 = vpop.permute.xlu0 %779
    %v782 = vsel %vm48, %v780, 0.0
    %783 = vadd.xlane.f32.xlu0 %v782
    %v784 = vpop.xlane.xlu0 %783
    %v785 = vadd.f32 %v784, %v55
    %787 = vrot.lane.b32.xlu0 %v785, 4
    %v788 = vpop.permute.xlu0 %787
    %v790 = vmul.f32 %v58, %v788
    %v791 = vadd.f32 %v57, %v790
    %v792 = vsub.f32 %v15, %v788
    %v793 = vand.u32 2147483647, %v792
    %v794 = vmul.f32 %v793, %v16
    %796 = vrot.lane.b32.xlu0 %v794, 124
    %v797 = vpop.permute.xlu0 %796
    %v799 = vsel %vm64, %v797, 0.0
    %800 = vadd.xlane.f32.xlu0 %v799
    %v801 = vpop.xlane.xlu0 %800
    %v802 = vrot.slane %v801, 4
    %v803 = vadd.f32 %v801, %v802
    %v804 = vrot.slane %v803, 2
    %v805 = vadd.f32 %v803, %v804
    %v806 = vrot.slane %v805, 1
    %v807 = vadd.f32 %v805, %v806
    %s808 = vtos %v807
    %v809 = vstv %s808
    %810 = vrot.lane.b32.xlu0 %v16, 124
    %v811 = vpop.permute.xlu0 %810
    %v813 = vsel %vm64, %v811, 0.0
    %814 = vadd.xlane.f32.xlu0 %v813
    %v815 = vpop.xlane.xlu0 %814
    %v816 = vrot.slane %v815, 4
    %v817 = vadd.f32 %v815, %v816
    %v818 = vrot.slane %v817, 2
    %v819 = vadd.f32 %v817, %v818
    %v820 = vrot.slane %v819, 1
    %v821 = vadd.f32 %v819, %v820
    %s822 = vtos %v821
    %v823 = vstv %s822
    %v824 = vadd.f32 %v823, 1e-05
    %v825 = vrcp.pop %v824
    %v826 = vmul.f32 %v809, %v825
    %v827 = vadd.f32 %v646, %v826
    %829 = vset.pattern.permute.xlu0 4
    %830 = vperm.xlu0 %829, %v791
    %v831 = vpop.permute.xlu0 %830
    %v833 = vmul.f32 %v831, %v99
    %834 = vset.pattern.permute.xlu0 4
    %835 = vperm.xlu0 %834, %v16
    %v836 = vpop.permute.xlu0 %835
    %v838 = vmul.f32 %v836, %v109
    %v839 = vadd.f32 %v833, %v838
    %841 = vrot.lane.b32.xlu0 %v776, 32
    %v842 = vpop.permute.xlu0 %841
    %v843 = vsel %vm48, %v842, 0
    %845 = vmatprep.subr.mxu0 0.0
    %846 = vmatpush1.msra.mxu0 %v18
    %847 = vmatprep.subr.mxu0 0.0
    %848 = vmatpush1.msra.mxu0 %v19
    %849 = vmatprep.subr.mxu0 0.0
    %850 = vmatpush1.msra.mxu0 %v20
    %851 = vmatprep.subr.mxu0 0.0
    %852 = vmatpush1.msra.mxu0 %v21
    %853 = vmatprep.subr.mxu0 0.0
    %854 = vmatpush1.msra.mxu0 0.0
    %855 = vmatprep.subr.mxu0 0.0
    %856 = vmatpush1.msra.mxu0 0.0
    %857 = vmatprep.subr.mxu0 0.0
    %858 = vmatpush1.msra.mxu0 0.0
    %859 = vmatprep.subr.mxu0 0.0
    %860 = vmatpush1.msra.mxu0 0.0
    %861 = vmatprep.subr.mxu0 0.0
    %862 = vmatpush1.msra.mxu0 0.0
    %863 = vmatprep.subr.mxu0 0.0
    %864 = vmatpush1.msra.mxu0 0.0
    %865 = vmatprep.subr.mxu0 0.0
    %866 = vmatpush1.msra.mxu0 0.0
    %867 = vmatprep.subr.mxu0 0.0
    %868 = vmatpush1.msra.mxu0 0.0
    %869 = vmatprep.subr.mxu0 0.0
    %870 = vmatpush1.msra.mxu0 0.0
    %871 = vmatprep.subr.mxu0 0.0
    %872 = vmatpush1.msra.mxu0 0.0
    %873 = vmatprep.subr.mxu0 0.0
    %874 = vmatpush1.msra.mxu0 0.0
    %875 = vmatprep.subr.mxu0 0.0
    %876 = vmatpush1.msra.mxu0 0.0
    %877 = vmatprep.subr.mxu0 0.0
    %878 = vmatpush1.msra.mxu0 0.0
    %879 = vmatprep.subr.mxu0 0.0
    %880 = vmatpush1.msra.mxu0 0.0
    %881 = vmatprep.subr.mxu0 0.0
    %882 = vmatpush1.msra.mxu0 0.0
    %883 = vmatprep.subr.mxu0 0.0
    %884 = vmatpush1.msra.mxu0 0.0
    %885 = vmatprep.subr.mxu0 0.0
    %886 = vmatpush1.msra.mxu0 0.0
    %887 = vmatprep.subr.mxu0 0.0
    %888 = vmatpush1.msra.mxu0 0.0
    %889 = vmatprep.subr.mxu0 0.0
    %890 = vmatpush1.msra.mxu0 0.0
    %891 = vmatprep.subr.mxu0 0.0
    %892 = vmatpush1.msra.mxu0 0.0
    %893 = vmatprep.subr.mxu0 0.0
    %894 = vmatpush1.msra.mxu0 0.0
    %895 = vmatprep.subr.mxu0 0.0
    %896 = vmatpush1.msra.mxu0 0.0
    %897 = vmatprep.subr.mxu0 0.0
    %898 = vmatpush1.msra.mxu0 0.0
    %899 = vmatprep.subr.mxu0 0.0
    %900 = vmatpush1.msra.mxu0 0.0
    %901 = vmatprep.subr.mxu0 0.0
    %902 = vmatpush1.msra.mxu0 0.0
    %903 = vmatprep.subr.mxu0 0.0
    %904 = vmatpush1.msra.mxu0 0.0
    %905 = vmatprep.subr.mxu0 0.0
    %906 = vmatpush1.msra.mxu0 0.0
    %907 = vmatprep.subr.mxu0 0.0
    %908 = vmatpush1.msra.mxu0 0.0
    %909 = vmatprep.mubr.f32.mxu0 0.0
    %910 = vmatmul.mubr.f32.gmra.mrb[0].mxu0 %v843
    %v911 = vpop.f32.mrb[0].mxu0
    %v912 = vadd.f32 0.0, %v911
    %v913 = vpop.f32.mrb[0].mxu0
    %914 = vdwg.mxu0
    %v915 = vadd.f32 %v839, %v912
    %v916 = vadd.f32 %v915, %v189
    %v917 = vxor.u32 %v916, 2147483648
    %v918 = vmul.f32 %v917, 1.442695
    %v919 = vpow.pop %v918
    %v920 = vadd.f32 %v919, 1.0
    %v921 = vrcp.pop %v920
    %v922 = vmul.f32 1.0, %v921
    %v923 = vtanh.pop %v916
    %v924 = vmul.f32 %v922, %v753
    %926 = vrot.lane.b32.xlu0 %v923, 64
    %v927 = vpop.permute.xlu0 %926
    %v929 = vmul.f32 %v922, %v927
    %931 = vrot.lane.b32.xlu0 %v929, 32
    %v932 = vpop.permute.xlu0 %931
    %v934 = vadd.f32 %v924, %v932
    %v935 = vtanh.pop %v934
    %937 = vrot.lane.b32.xlu0 %v935, 64
    %v938 = vpop.permute.xlu0 %937
    %v940 = vmul.f32 %v922, %v938
    %vm941 = vcmask 39968
    %942 = vst.msk [vmem:[#allocation2] sm:$0xff] %vm941, %v791
    %943 = vset.pattern.permute.xlu0 5
    %944 = vperm.xlu0 %943, %v17
    %v945 = vpop.permute.xlu0 %944
    %v947 = vmul.f32 %v945, %v32
    %v948 = vadd.f32 %v947, %v36
    %v949 = vmax.f32 %v948, 0.0
    %v950 = vsub.f32 0.0, %v949
    %v951 = vmul.f32 %v950, 1.442695
    %v952 = vpow.pop %v951
    %954 = vrot.lane.b32.xlu0 %v952, 96
    %v955 = vpop.permute.xlu0 %954
    %v957 = vmul.f32 %v940, %v955
    %v958 = vmul.f32 %v957, %v232
    %960 = vrot.lane.b32.xlu0 %v958, 32
    %v961 = vpop.permute.xlu0 %960
    %v963 = vsel %vm48, %v961, 0.0
    %964 = vadd.xlane.f32.xlu0 %v963
    %v965 = vpop.xlane.xlu0 %964
    %v966 = vadd.f32 %v965, %v55
    %968 = vrot.lane.b32.xlu0 %v966, 5
    %v969 = vpop.permute.xlu0 %968
    %v971 = vmul.f32 %v58, %v969
    %v972 = vadd.f32 %v57, %v971
    %v973 = vsub.f32 %v15, %v969
    %v974 = vand.u32 2147483647, %v973
    %v975 = vmul.f32 %v974, %v16
    %977 = vrot.lane.b32.xlu0 %v975, 123
    %v978 = vpop.permute.xlu0 %977
    %v980 = vsel %vm64, %v978, 0.0
    %981 = vadd.xlane.f32.xlu0 %v980
    %v982 = vpop.xlane.xlu0 %981
    %v983 = vrot.slane %v982, 4
    %v984 = vadd.f32 %v982, %v983
    %v985 = vrot.slane %v984, 2
    %v986 = vadd.f32 %v984, %v985
    %v987 = vrot.slane %v986, 1
    %v988 = vadd.f32 %v986, %v987
    %s989 = vtos %v988
    %v990 = vstv %s989
    %991 = vrot.lane.b32.xlu0 %v16, 123
    %v992 = vpop.permute.xlu0 %991
    %v994 = vsel %vm64, %v992, 0.0
    %995 = vadd.xlane.f32.xlu0 %v994
    %v996 = vpop.xlane.xlu0 %995
    %v997 = vrot.slane %v996, 4
    %v998 = vadd.f32 %v996, %v997
    %v999 = vrot.slane %v998, 2
    %v1000 = vadd.f32 %v998, %v999
    %v1001 = vrot.slane %v1000, 1
    %v1002 = vadd.f32 %v1000, %v1001
    %s1003 = vtos %v1002
    %v1004 = vstv %s1003
    %v1005 = vadd.f32 %v1004, 1e-05
    %v1006 = vrcp.pop %v1005
    %v1007 = vmul.f32 %v990, %v1006
    %v1008 = vadd.f32 %v827, %v1007
    %1010 = vset.pattern.permute.xlu0 5
    %1011 = vperm.xlu0 %1010, %v972
    %v1012 = vpop.permute.xlu0 %1011
    %v1014 = vmul.f32 %v1012, %v99
    %1015 = vset.pattern.permute.xlu0 5
    %1016 = vperm.xlu0 %1015, %v16
    %v1017 = vpop.permute.xlu0 %1016
    %v1019 = vmul.f32 %v1017, %v109
    %v1020 = vadd.f32 %v1014, %v1019
    %1022 = vrot.lane.b32.xlu0 %v957, 32
    %v1023 = vpop.permute.xlu0 %1022
    %v1024 = vsel %vm48, %v1023, 0
    %1026 = vmatprep.subr.mxu0 0.0
    %1027 = vmatpush1.msra.mxu0 %v18
    %1028 = vmatprep.subr.mxu0 0.0
    %1029 = vmatpush1.msra.mxu0 %v19
    %1030 = vmatprep.subr.mxu0 0.0
    %1031 = vmatpush1.msra.mxu0 %v20
    %1032 = vmatprep.subr.mxu0 0.0
    %1033 = vmatpush1.msra.mxu0 %v21
    %1034 = vmatprep.subr.mxu0 0.0
    %1035 = vmatpush1.msra.mxu0 0.0
    %1036 = vmatprep.subr.mxu0 0.0
    %1037 = vmatpush1.msra.mxu0 0.0
    %1038 = vmatprep.subr.mxu0 0.0
    %1039 = vmatpush1.msra.mxu0 0.0
    %1040 = vmatprep.subr.mxu0 0.0
    %1041 = vmatpush1.msra.mxu0 0.0
    %1042 = vmatprep.subr.mxu0 0.0
    %1043 = vmatpush1.msra.mxu0 0.0
    %1044 = vmatprep.subr.mxu0 0.0
    %1045 = vmatpush1.msra.mxu0 0.0
    %1046 = vmatprep.subr.mxu0 0.0
    %1047 = vmatpush1.msra.mxu0 0.0
    %1048 = vmatprep.subr.mxu0 0.0
    %1049 = vmatpush1.msra.mxu0 0.0
    %1050 = vmatprep.subr.mxu0 0.0
    %1051 = vmatpush1.msra.mxu0 0.0
    %1052 = vmatprep.subr.mxu0 0.0
    %1053 = vmatpush1.msra.mxu0 0.0
    %1054 = vmatprep.subr.mxu0 0.0
    %1055 = vmatpush1.msra.mxu0 0.0
    %1056 = vmatprep.subr.mxu0 0.0
    %1057 = vmatpush1.msra.mxu0 0.0
    %1058 = vmatprep.subr.mxu0 0.0
    %1059 = vmatpush1.msra.mxu0 0.0
    %1060 = vmatprep.subr.mxu0 0.0
    %1061 = vmatpush1.msra.mxu0 0.0
    %1062 = vmatprep.subr.mxu0 0.0
    %1063 = vmatpush1.msra.mxu0 0.0
    %1064 = vmatprep.subr.mxu0 0.0
    %1065 = vmatpush1.msra.mxu0 0.0
    %1066 = vmatprep.subr.mxu0 0.0
    %1067 = vmatpush1.msra.mxu0 0.0
    %1068 = vmatprep.subr.mxu0 0.0
    %1069 = vmatpush1.msra.mxu0 0.0
    %1070 = vmatprep.subr.mxu0 0.0
    %1071 = vmatpush1.msra.mxu0 0.0
    %1072 = vmatprep.subr.mxu0 0.0
    %1073 = vmatpush1.msra.mxu0 0.0
    %1074 = vmatprep.subr.mxu0 0.0
    %1075 = vmatpush1.msra.mxu0 0.0
    %1076 = vmatprep.subr.mxu0 0.0
    %1077 = vmatpush1.msra.mxu0 0.0
    %1078 = vmatprep.subr.mxu0 0.0
    %1079 = vmatpush1.msra.mxu0 0.0
    %1080 = vmatprep.subr.mxu0 0.0
    %1081 = vmatpush1.msra.mxu0 0.0
    %1082 = vmatprep.subr.mxu0 0.0
    %1083 = vmatpush1.msra.mxu0 0.0
    %1084 = vmatprep.subr.mxu0 0.0
    %1085 = vmatpush1.msra.mxu0 0.0
    %1086 = vmatprep.subr.mxu0 0.0
    %1087 = vmatpush1.msra.mxu0 0.0
    %1088 = vmatprep.subr.mxu0 0.0
    %1089 = vmatpush1.msra.mxu0 0.0
    %1090 = vmatprep.mubr.f32.mxu0 0.0
    %1091 = vmatmul.mubr.f32.gmra.mrb[0].mxu0 %v1024
    %v1092 = vpop.f32.mrb[0].mxu0
    %v1093 = vadd.f32 0.0, %v1092
    %v1094 = vpop.f32.mrb[0].mxu0
    %1095 = vdwg.mxu0
    %v1096 = vadd.f32 %v1020, %v1093
    %v1097 = vadd.f32 %v1096, %v189
    %v1098 = vxor.u32 %v1097, 2147483648
    %v1099 = vmul.f32 %v1098, 1.442695
    %v1100 = vpow.pop %v1099
    %v1101 = vadd.f32 %v1100, 1.0
    %v1102 = vrcp.pop %v1101
    %v1103 = vmul.f32 1.0, %v1102
    %v1104 = vtanh.pop %v1097
    %v1105 = vmul.f32 %v1103, %v934
    %1107 = vrot.lane.b32.xlu0 %v1104, 64
    %v1108 = vpop.permute.xlu0 %1107
    %v1110 = vmul.f32 %v1103, %v1108
    %1112 = vrot.lane.b32.xlu0 %v1110, 32
    %v1113 = vpop.permute.xlu0 %1112
    %v1115 = vadd.f32 %v1105, %v1113
    %v1116 = vtanh.pop %v1115
    %1118 = vrot.lane.b32.xlu0 %v1116, 64
    %v1119 = vpop.permute.xlu0 %1118
    %v1121 = vmul.f32 %v1103, %v1119
    %vm1122 = vcmask 48168
    %1123 = vst.msk [vmem:[#allocation2] sm:$0xff] %vm1122, %v972
    %1124 = vset.pattern.permute.xlu0 6
    %1125 = vperm.xlu0 %1124, %v17
    %v1126 = vpop.permute.xlu0 %1125
    %v1128 = vmul.f32 %v1126, %v32
    %v1129 = vadd.f32 %v1128, %v36
    %v1130 = vmax.f32 %v1129, 0.0
    %v1131 = vsub.f32 0.0, %v1130
    %v1132 = vmul.f32 %v1131, 1.442695
    %v1133 = vpow.pop %v1132
    %1135 = vrot.lane.b32.xlu0 %v1133, 96
    %v1136 = vpop.permute.xlu0 %1135
    %v1138 = vmul.f32 %v1121, %v1136
    %v1139 = vmul.f32 %v1138, %v232
    %1141 = vrot.lane.b32.xlu0 %v1139, 32
    %v1142 = vpop.permute.xlu0 %1141
    %v1144 = vsel %vm48, %v1142, 0.0
    %1145 = vadd.xlane.f32.xlu0 %v1144
    %v1146 = vpop.xlane.xlu0 %1145
    %v1147 = vadd.f32 %v1146, %v55
    %1149 = vrot.lane.b32.xlu0 %v1147, 6
    %v1150 = vpop.permute.xlu0 %1149
    %v1152 = vmul.f32 %v58, %v1150
    %v1153 = vadd.f32 %v57, %v1152
    %v1154 = vsub.f32 %v15, %v1150
    %v1155 = vand.u32 2147483647, %v1154
    %v1156 = vmul.f32 %v1155, %v16
    %1158 = vrot.lane.b32.xlu0 %v1156, 122
    %v1159 = vpop.permute.xlu0 %1158
    %v1161 = vsel %vm64, %v1159, 0.0
    %1162 = vadd.xlane.f32.xlu0 %v1161
    %v1163 = vpop.xlane.xlu0 %1162
    %v1164 = vrot.slane %v1163, 4
    %v1165 = vadd.f32 %v1163, %v1164
    %v1166 = vrot.slane %v1165, 2
    %v1167 = vadd.f32 %v1165, %v1166
    %v1168 = vrot.slane %v1167, 1
    %v1169 = vadd.f32 %v1167, %v1168
    %s1170 = vtos %v1169
    %v1171 = vstv %s1170
    %1172 = vrot.lane.b32.xlu0 %v16, 122
    %v1173 = vpop.permute.xlu0 %1172
    %v1175 = vsel %vm64, %v1173, 0.0
    %1176 = vadd.xlane.f32.xlu0 %v1175
    %v1177 = vpop.xlane.xlu0 %1176
    %v1178 = vrot.slane %v1177, 4
    %v1179 = vadd.f32 %v1177, %v1178
    %v1180 = vrot.slane %v1179, 2
    %v1181 = vadd.f32 %v1179, %v1180
    %v1182 = vrot.slane %v1181, 1
    %v1183 = vadd.f32 %v1181, %v1182
    %s1184 = vtos %v1183
    %v1185 = vstv %s1184
    %v1186 = vadd.f32 %v1185, 1e-05
    %v1187 = vrcp.pop %v1186
    %v1188 = vmul.f32 %v1171, %v1187
    %v1189 = vadd.f32 %v1008, %v1188
    %1191 = vset.pattern.permute.xlu0 6
    %1192 = vperm.xlu0 %1191, %v1153
    %v1193 = vpop.permute.xlu0 %1192
    %v1195 = vmul.f32 %v1193, %v99
    %1196 = vset.pattern.permute.xlu0 6
    %1197 = vperm.xlu0 %1196, %v16
    %v1198 = vpop.permute.xlu0 %1197
    %v1200 = vmul.f32 %v1198, %v109
    %v1201 = vadd.f32 %v1195, %v1200
    %1203 = vrot.lane.b32.xlu0 %v1138, 32
    %v1204 = vpop.permute.xlu0 %1203
    %v1205 = vsel %vm48, %v1204, 0
    %1207 = vmatprep.subr.mxu0 0.0
    %1208 = vmatpush1.msra.mxu0 %v18
    %1209 = vmatprep.subr.mxu0 0.0
    %1210 = vmatpush1.msra.mxu0 %v19
    %1211 = vmatprep.subr.mxu0 0.0
    %1212 = vmatpush1.msra.mxu0 %v20
    %1213 = vmatprep.subr.mxu0 0.0
    %1214 = vmatpush1.msra.mxu0 %v21
    %1215 = vmatprep.subr.mxu0 0.0
    %1216 = vmatpush1.msra.mxu0 0.0
    %1217 = vmatprep.subr.mxu0 0.0
    %1218 = vmatpush1.msra.mxu0 0.0
    %1219 = vmatprep.subr.mxu0 0.0
    %1220 = vmatpush1.msra.mxu0 0.0
    %1221 = vmatprep.subr.mxu0 0.0
    %1222 = vmatpush1.msra.mxu0 0.0
    %1223 = vmatprep.subr.mxu0 0.0
    %1224 = vmatpush1.msra.mxu0 0.0
    %1225 = vmatprep.subr.mxu0 0.0
    %1226 = vmatpush1.msra.mxu0 0.0
    %1227 = vmatprep.subr.mxu0 0.0
    %1228 = vmatpush1.msra.mxu0 0.0
    %1229 = vmatprep.subr.mxu0 0.0
    %1230 = vmatpush1.msra.mxu0 0.0
    %1231 = vmatprep.subr.mxu0 0.0
    %1232 = vmatpush1.msra.mxu0 0.0
    %1233 = vmatprep.subr.mxu0 0.0
    %1234 = vmatpush1.msra.mxu0 0.0
    %1235 = vmatprep.subr.mxu0 0.0
    %1236 = vmatpush1.msra.mxu0 0.0
    %1237 = vmatprep.subr.mxu0 0.0
    %1238 = vmatpush1.msra.mxu0 0.0
    %1239 = vmatprep.subr.mxu0 0.0
    %1240 = vmatpush1.msra.mxu0 0.0
    %1241 = vmatprep.subr.mxu0 0.0
    %1242 = vmatpush1.msra.mxu0 0.0
    %1243 = vmatprep.subr.mxu0 0.0
    %1244 = vmatpush1.msra.mxu0 0.0
    %1245 = vmatprep.subr.mxu0 0.0
    %1246 = vmatpush1.msra.mxu0 0.0
    %1247 = vmatprep.subr.mxu0 0.0
    %1248 = vmatpush1.msra.mxu0 0.0
    %1249 = vmatprep.subr.mxu0 0.0
    %1250 = vmatpush1.msra.mxu0 0.0
    %1251 = vmatprep.subr.mxu0 0.0
    %1252 = vmatpush1.msra.mxu0 0.0
    %1253 = vmatprep.subr.mxu0 0.0
    %1254 = vmatpush1.msra.mxu0 0.0
    %1255 = vmatprep.subr.mxu0 0.0
    %1256 = vmatpush1.msra.mxu0 0.0
    %1257 = vmatprep.subr.mxu0 0.0
    %1258 = vmatpush1.msra.mxu0 0.0
    %1259 = vmatprep.subr.mxu0 0.0
    %1260 = vmatpush1.msra.mxu0 0.0
    %1261 = vmatprep.subr.mxu0 0.0
    %1262 = vmatpush1.msra.mxu0 0.0
    %1263 = vmatprep.subr.mxu0 0.0
    %1264 = vmatpush1.msra.mxu0 0.0
    %1265 = vmatprep.subr.mxu0 0.0
    %1266 = vmatpush1.msra.mxu0 0.0
    %1267 = vmatprep.subr.mxu0 0.0
    %1268 = vmatpush1.msra.mxu0 0.0
    %1269 = vmatprep.subr.mxu0 0.0
    %1270 = vmatpush1.msra.mxu0 0.0
    %1271 = vmatprep.mubr.f32.mxu0 0.0
    %1272 = vmatmul.mubr.f32.gmra.mrb[0].mxu0 %v1205
    %v1273 = vpop.f32.mrb[0].mxu0
    %v1274 = vadd.f32 0.0, %v1273
    %v1275 = vpop.f32.mrb[0].mxu0
    %1276 = vdwg.mxu0
    %v1277 = vadd.f32 %v1201, %v1274
    %v1278 = vadd.f32 %v1277, %v189
    %v1279 = vxor.u32 %v1278, 2147483648
    %v1280 = vmul.f32 %v1279, 1.442695
    %v1281 = vpow.pop %v1280
    %v1282 = vadd.f32 %v1281, 1.0
    %v1283 = vrcp.pop %v1282
    %v1284 = vmul.f32 1.0, %v1283
    %v1285 = vtanh.pop %v1278
    %v1286 = vmul.f32 %v1284, %v1115
    %1288 = vrot.lane.b32.xlu0 %v1285, 64
    %v1289 = vpop.permute.xlu0 %1288
    %v1291 = vmul.f32 %v1284, %v1289
    %1293 = vrot.lane.b32.xlu0 %v1291, 32
    %v1294 = vpop.permute.xlu0 %1293
    %v1296 = vadd.f32 %v1286, %v1294
    %v1297 = vtanh.pop %v1296
    %1299 = vrot.lane.b32.xlu0 %v1297, 64
    %v1300 = vpop.permute.xlu0 %1299
    %v1302 = vmul.f32 %v1284, %v1300
    %vm1303 = vcmask 56368
    %1304 = vst.msk [vmem:[#allocation2] sm:$0xff] %vm1303, %v1153
    %1305 = vset.pattern.permute.xlu0 7
    %1306 = vperm.xlu0 %1305, %v17
    %v1307 = vpop.permute.xlu0 %1306
    %v1309 = vmul.f32 %v1307, %v32
    %v1310 = vadd.f32 %v1309, %v36
    %v1311 = vmax.f32 %v1310, 0.0
    %v1312 = vsub.f32 0.0, %v1311
    %v1313 = vmul.f32 %v1312, 1.442695
    %v1314 = vpow.pop %v1313
    %1316 = vrot.lane.b32.xlu0 %v1314, 96
    %v1317 = vpop.permute.xlu0 %1316
    %v1319 = vmul.f32 %v1302, %v1317
    %v1320 = vmul.f32 %v1319, %v232
    %1322 = vrot.lane.b32.xlu0 %v1320, 32
    %v1323 = vpop.permute.xlu0 %1322
    %v1325 = vsel %vm48, %v1323, 0.0
    %1326 = vadd.xlane.f32.xlu0 %v1325
    %v1327 = vpop.xlane.xlu0 %1326
    %v1328 = vadd.f32 %v1327, %v55
    %1330 = vrot.lane.b32.xlu0 %v1328, 7
    %v1331 = vpop.permute.xlu0 %1330
    %v1333 = vmul.f32 %v58, %v1331
    %v1334 = vadd.f32 %v57, %v1333
    %v1335 = vsub.f32 %v15, %v1331
    %v1336 = vand.u32 2147483647, %v1335
    %v1337 = vmul.f32 %v1336, %v16
    %1339 = vrot.lane.b32.xlu0 %v1337, 121
    %v1340 = vpop.permute.xlu0 %1339
    %v1342 = vsel %vm64, %v1340, 0.0
    %1343 = vadd.xlane.f32.xlu0 %v1342
    %v1344 = vpop.xlane.xlu0 %1343
    %v1345 = vrot.slane %v1344, 4
    %v1346 = vadd.f32 %v1344, %v1345
    %v1347 = vrot.slane %v1346, 2
    %v1348 = vadd.f32 %v1346, %v1347
    %v1349 = vrot.slane %v1348, 1
    %v1350 = vadd.f32 %v1348, %v1349
    %s1351 = vtos %v1350
    %v1352 = vstv %s1351
    %1353 = vrot.lane.b32.xlu0 %v16, 121
    %v1354 = vpop.permute.xlu0 %1353
    %v1356 = vsel %vm64, %v1354, 0.0
    %1357 = vadd.xlane.f32.xlu0 %v1356
    %v1358 = vpop.xlane.xlu0 %1357
    %v1359 = vrot.slane %v1358, 4
    %v1360 = vadd.f32 %v1358, %v1359
    %v1361 = vrot.slane %v1360, 2
    %v1362 = vadd.f32 %v1360, %v1361
    %v1363 = vrot.slane %v1362, 1
    %v1364 = vadd.f32 %v1362, %v1363
    %s1365 = vtos %v1364
    %v1366 = vstv %s1365
    %v1367 = vadd.f32 %v1366, 1e-05
    %v1368 = vrcp.pop %v1367
    %v1369 = vmul.f32 %v1352, %v1368
    %v1370 = vadd.f32 %v1189, %v1369
    %1372 = vset.pattern.permute.xlu0 7
    %1373 = vperm.xlu0 %1372, %v1334
    %v1374 = vpop.permute.xlu0 %1373
    %v1376 = vmul.f32 %v1374, %v99
    %1377 = vset.pattern.permute.xlu0 7
    %1378 = vperm.xlu0 %1377, %v16
    %v1379 = vpop.permute.xlu0 %1378
    %v1381 = vmul.f32 %v1379, %v109
    %v1382 = vadd.f32 %v1376, %v1381
    %1384 = vrot.lane.b32.xlu0 %v1319, 32
    %v1385 = vpop.permute.xlu0 %1384
    %v1386 = vsel %vm48, %v1385, 0
    %1388 = vmatprep.subr.mxu0 0.0
    %1389 = vmatpush1.msra.mxu0 %v18
    %1390 = vmatprep.subr.mxu0 0.0
    %1391 = vmatpush1.msra.mxu0 %v19
    %1392 = vmatprep.subr.mxu0 0.0
    %1393 = vmatpush1.msra.mxu0 %v20
    %1394 = vmatprep.subr.mxu0 0.0
    %1395 = vmatpush1.msra.mxu0 %v21
    %1396 = vmatprep.subr.mxu0 0.0
    %1397 = vmatpush1.msra.mxu0 0.0
    %1398 = vmatprep.subr.mxu0 0.0
    %1399 = vmatpush1.msra.mxu0 0.0
    %1400 = vmatprep.subr.mxu0 0.0
    %1401 = vmatpush1.msra.mxu0 0.0
    %1402 = vmatprep.subr.mxu0 0.0
    %1403 = vmatpush1.msra.mxu0 0.0
    %1404 = vmatprep.subr.mxu0 0.0
    %1405 = vmatpush1.msra.mxu0 0.0
    %1406 = vmatprep.subr.mxu0 0.0
    %1407 = vmatpush1.msra.mxu0 0.0
    %1408 = vmatprep.subr.mxu0 0.0
    %1409 = vmatpush1.msra.mxu0 0.0
    %1410 = vmatprep.subr.mxu0 0.0
    %1411 = vmatpush1.msra.mxu0 0.0
    %1412 = vmatprep.subr.mxu0 0.0
    %1413 = vmatpush1.msra.mxu0 0.0
    %1414 = vmatprep.subr.mxu0 0.0
    %1415 = vmatpush1.msra.mxu0 0.0
    %1416 = vmatprep.subr.mxu0 0.0
    %1417 = vmatpush1.msra.mxu0 0.0
    %1418 = vmatprep.subr.mxu0 0.0
    %1419 = vmatpush1.msra.mxu0 0.0
    %1420 = vmatprep.subr.mxu0 0.0
    %1421 = vmatpush1.msra.mxu0 0.0
    %1422 = vmatprep.subr.mxu0 0.0
    %1423 = vmatpush1.msra.mxu0 0.0
    %1424 = vmatprep.subr.mxu0 0.0
    %1425 = vmatpush1.msra.mxu0 0.0
    %1426 = vmatprep.subr.mxu0 0.0
    %1427 = vmatpush1.msra.mxu0 0.0
    %1428 = vmatprep.subr.mxu0 0.0
    %1429 = vmatpush1.msra.mxu0 0.0
    %1430 = vmatprep.subr.mxu0 0.0
    %1431 = vmatpush1.msra.mxu0 0.0
    %1432 = vmatprep.subr.mxu0 0.0
    %1433 = vmatpush1.msra.mxu0 0.0
    %1434 = vmatprep.subr.mxu0 0.0
    %1435 = vmatpush1.msra.mxu0 0.0
    %1436 = vmatprep.subr.mxu0 0.0
    %1437 = vmatpush1.msra.mxu0 0.0
    %1438 = vmatprep.subr.mxu0 0.0
    %1439 = vmatpush1.msra.mxu0 0.0
    %1440 = vmatprep.subr.mxu0 0.0
    %1441 = vmatpush1.msra.mxu0 0.0
    %1442 = vmatprep.subr.mxu0 0.0
    %1443 = vmatpush1.msra.mxu0 0.0
    %1444 = vmatprep.subr.mxu0 0.0
    %1445 = vmatpush1.msra.mxu0 0.0
    %1446 = vmatprep.subr.mxu0 0.0
    %1447 = vmatpush1.msra.mxu0 0.0
    %1448 = vmatprep.subr.mxu0 0.0
    %1449 = vmatpush1.msra.mxu0 0.0
    %1450 = vmatprep.subr.mxu0 0.0
    %1451 = vmatpush1.msra.mxu0 0.0
    %1452 = vmatprep.mubr.f32.mxu0 0.0
    %1453 = vmatmul.mubr.f32.gmra.mrb[0].mxu0 %v1386
    %v1454 = vpop.f32.mrb[0].mxu0
    %v1455 = vadd.f32 0.0, %v1454
    %v1456 = vpop.f32.mrb[0].mxu0
    %1457 = vdwg.mxu0
    %v1458 = vadd.f32 %v1382, %v1455
    %v1459 = vadd.f32 %v1458, %v189
    %v1460 = vxor.u32 %v1459, 2147483648
    %v1461 = vmul.f32 %v1460, 1.442695
    %v1462 = vpow.pop %v1461
    %v1463 = vadd.f32 %v1462, 1.0
    %v1464 = vrcp.pop %v1463
    %v1465 = vmul.f32 1.0, %v1464
    %v1466 = vtanh.pop %v1459
    %v1467 = vmul.f32 %v1465, %v1296
    %1469 = vrot.lane.b32.xlu0 %v1466, 64
    %v1470 = vpop.permute.xlu0 %1469
    %v1472 = vmul.f32 %v1465, %v1470
    %1474 = vrot.lane.b32.xlu0 %v1472, 32
    %v1475 = vpop.permute.xlu0 %1474
    %v1477 = vadd.f32 %v1467, %v1475
    %v1478 = vtanh.pop %v1477
    %1480 = vrot.lane.b32.xlu0 %v1478, 64
    %v1481 = vpop.permute.xlu0 %1480
    %v1483 = vmul.f32 %v1465, %v1481
    %vm1484 = vcmask 64568
    %1485 = vst.msk [vmem:[#allocation2] sm:$0xff] %vm1484, %v1334
    %v1486 = vmul.f32 %v1483, %v32
    %1488 = vrot.lane.b32.xlu0 %v1486, 32
    %v1489 = vpop.permute.xlu0 %1488
    %v1491 = vsel %vm48, %v1489, 0.0
    %1492 = vadd.xlane.f32.xlu0 %v1491
    %v1493 = vpop.xlane.xlu0 %1492
    %v1494 = vadd.f32 %v1493, %v55
    %v1495 = vsub.f32 0.0, %v1494
    %v1496 = vmax.f32 %v1495, 0.0
    %1498 = vrot.lane.b32.xlu0 %v23, 1
    %v1499 = vpop.permute.xlu0 %1498
    %v1501 = vmul.f32 %v1494, %v1499
    %v1502 = vsub.f32 %v1494, %v1501
    %v1503 = vadd.f32 %v1502, %v1496
    %v1504 = vsub.f32 0.0, %v1496
    %v1505 = vmul.f32 %v1504, 1.442695
    %v1506 = vpow.pop %v1505
    %v1507 = vsub.f32 %v1495, %v1496
    %v1508 = vmul.f32 %v1507, 1.442695
    %v1509 = vpow.pop %v1508
    %v1510 = vadd.f32 %v1506, %v1509
    %v1511 = vlog2.pop %v1510
    %v1512 = vmul.f32 %v1511, 0.6931472
    %v1513 = vadd.f32 %v1503, %v1512
    %v1514 = vmul.f32 %v1513, %v23
    %1516 = vrot.lane.b32.xlu0 %v1514, 127
    %v1517 = vpop.permute.xlu0 %1516
    %v1519 = vsel %vm64, %v1517, 0.0
    %1520 = vadd.xlane.f32.xlu0 %v1519
    %v1521 = vpop.xlane.xlu0 %1520
    %v1522 = vrot.slane %v1521, 4
    %v1523 = vadd.f32 %v1521, %v1522
    %v1524 = vrot.slane %v1523, 2
    %v1525 = vadd.f32 %v1523, %v1524
    %v1526 = vrot.slane %v1525, 1
    %v1527 = vadd.f32 %v1525, %v1526
    %s1528 = vtos %v1527
    %v1529 = vstv %s1528
    %1530 = vrot.lane.b32.xlu0 %v23, 127
    %v1531 = vpop.permute.xlu0 %1530
    %v1533 = vsel %vm64, %v1531, 0.0
    %1534 = vadd.xlane.f32.xlu0 %v1533
    %v1535 = vpop.xlane.xlu0 %1534
    %v1536 = vrot.slane %v1535, 4
    %v1537 = vadd.f32 %v1535, %v1536
    %v1538 = vrot.slane %v1537, 2
    %v1539 = vadd.f32 %v1537, %v1538
    %v1540 = vrot.slane %v1539, 1
    %v1541 = vadd.f32 %v1539, %v1540
    %s1542 = vtos %v1541
    %v1543 = vstv %s1542
    %v1544 = vadd.f32 %v1543, 1e-05
    %v1545 = vrcp.pop %v1544
    %v1546 = vmul.f32 %v1529, %v1545
    %v1547 = vmul.f32 %v1370, 0.3
    %v1548 = vadd.f32 %v1547, %v1546
    %v1549 = vxor.u32 %v1494, 2147483648
    %v1550 = vmul.f32 %v1549, 1.442695
    %v1551 = vpow.pop %v1550
    %v1552 = vadd.f32 %v1551, 1.0
    %v1553 = vrcp.pop %v1552
    %v1554 = vmul.f32 1.0, %v1553
    %1556 = vrot.lane.b32.xlu0 %v1554, 7
    %v1557 = vpop.permute.xlu0 %1556
    %vm1559 = vcmask 72768
    %1560 = vst.msk [vmem:[#allocation2] sm:$0xff] %vm1559, %v1557
    %vm1561 = vcmask 80968
    %1562 = vst.msk [vmem:[#allocation2] sm:$0xff] %vm1561, %v1548
    // Predicated region
    $region14: #{tpu_custom_call.1} parent=1 // pred_check
      _
    $region15: #{tpu_custom_call.1} parent=1 // pred_check_branch
      %1564 = sbr.rel (0) target = $region17
    $region16: #{tpu_custom_call.1} parent=1 // pred_region
      %s1566 = ssub.s32 128, 128
      %1567 = vsyncadd [#allocation3], %s1566
      %s1569 = sshll.u32 [#allocation2], 4
      %s1570 = int_to_ptr.vmem [resolvable:$true] %s1569
      %1572 = dma.vmem_to_hbm [thread:$0]  %s1570, 128, %s3, [#allocation3]
    $region17: #{tpu_custom_call.1} parent=1 // pred_fallthru
      _
    // Predicated region
    $region18: #{tpu_custom_call.1} parent=1 // pred_check
      _
    $region19: #{tpu_custom_call.1} parent=1 // pred_check_branch
      %1574 = sbr.rel (0) target = $region21
    $region20: #{tpu_custom_call.1} parent=1 // pred_region
      %1575 = dma.done [#allocation3], 128
    $region21: #{tpu_custom_call.1} parent=1 // pred_fallthru
      _
    %1576 = vsyncpa [#allocation3], 1

</llo_original>
